<compile_context>
chip_gen: v7x
topology: tpu7x:2x2x1
jax: 0.10.0
libtpu: 0.0.40
codegen_flags: <defaults>
</compile_context>

<pallas_src>
import functools
import math

import jax
import jax.numpy as jnp
from jax.experimental import pallas as pl


# ----------------------------------------------------------------------------
# Shared math
# ----------------------------------------------------------------------------
def _layernorm(y, gamma, beta, eps=1e-5):
    mean = jnp.mean(y, axis=-1, keepdims=True)
    var = jnp.mean((y - mean) ** 2, axis=-1, keepdims=True)
    return (y - mean) * jax.lax.rsqrt(var + eps) * gamma + beta


# ----------------------------------------------------------------------------
# Kernel: whole MultiHeadAttn forward, full batch, single invocation
# ----------------------------------------------------------------------------
def mha_kernel(xq_ref, xk_ref, mask_ref,
               wq_ref, bq_ref, wk_ref, bk_ref, wv_ref, bv_ref,
               wo_ref, bo_ref, g_ref, beta_ref,
               out_ref, *, num_heads, d_q):
    B, Lq, Lk = mask_ref.shape          # static at trace time
    xq = xq_ref[...]                    # (B*Lq, d_e)  lane-dense slab
    xk = xk_ref[...]                    # (B*Lk, d_e)

    # Full-batch projections: one matmul each over all B*L rows.
    # 1/sqrt(d_q) folded into q (cheaper than scaling every (Lq,Lk) score tile).
    scale = 1.0 / math.sqrt(d_q)
    q = (jnp.dot(xq, wq_ref[...], preferred_element_type=jnp.float32)
         + bq_ref[...]) * scale                                   # (B*Lq, H*d_q)
    k = jnp.dot(xk, wk_ref[...], preferred_element_type=jnp.float32) + bk_ref[...]
    v = jnp.dot(xk, wv_ref[...], preferred_element_type=jnp.float32) + bv_ref[...]

    # Hoist the mask compare out of the head loop (one VPU compare total).
    masked = mask_ref[...] > 0.5        # (B, Lq, Lk) bool

    ctx_heads = []
    for h in range(num_heads):          # static unroll over heads (H=4)
        lo, hi = h * d_q, (h + 1) * d_q
        qh = q[:, lo:hi].reshape(B, Lq, d_q)   # leading-dim split: free
        kh = k[:, lo:hi].reshape(B, Lk, d_q)
        vh = v[:, lo:hi].reshape(B, Lk, d_q)

        # Batched over the batch axis in one contraction per stage.
        s = jnp.einsum('bqd,bkd->bqk', qh, kh,
                       preferred_element_type=jnp.float32)        # (B, Lq, Lk)
        s = jnp.where(masked, -1e9, s)         # masked_fill semantics (exact)
        s = s - jnp.max(s, axis=-1, keepdims=True)
        p = jnp.exp(s)
        # exact reciprocal keeps the 1e-4 tolerance; approx=True uses the EUP.
        p = p * pl.reciprocal(jnp.sum(p, axis=-1, keepdims=True), approx=False)
        ctx = jnp.einsum('bqk,bkd->bqd', p, vh,
                         preferred_element_type=jnp.float32)      # (B, Lq, d_q)
        ctx_heads.append(ctx.reshape(B * Lq, d_q))

    context = jnp.concatenate(ctx_heads, axis=-1)                 # (B*Lq, H*d_q)

    mixed = jnp.dot(context, wo_ref[...],
                    preferred_element_type=jnp.float32) + bo_ref[...]
    # Residual + LayerNorm, one lane-dense (B*Lq, d_e) store.
    out_ref[...] = _layernorm(xq + mixed, g_ref[...], beta_ref[...])


# ----------------------------------------------------------------------------
# Wrapper
# ----------------------------------------------------------------------------
def multi_head_attn(pre_q, pre_k, params, mask=None, *, num_heads, d_q):
    """Matches MultiHeadAttn.forward(pre_q, pre_k, mask)."""
    B, Lq, d_e = pre_q.shape
    Lk = pre_k.shape[1]
    if mask is None:
        mask_f = jnp.zeros((B, Lq, Lk), jnp.float32)
    else:
        mask_f = mask.astype(jnp.float32)

    kernel = functools.partial(mha_kernel, num_heads=num_heads, d_q=d_q)
    out = pl.pallas_call(
        kernel,
        out_shape=jax.ShapeDtypeStruct((B * Lq, d_e), jnp.float32),
        # No grid: single invocation, all operands fully resident in VMEM.
    )(pre_q.reshape(B * Lq, d_e), pre_k.reshape(B * Lk, d_e), mask_f,
      params["wq"], params["bq"], params["wk"], params["bk"],
      params["wv"], params["bv"], params["wo"], params["bo"],
      params["ln_g"], params["ln_b"])
    return out.reshape(B, Lq, d_e)


# ----------------------------------------------------------------------------
# Deterministic params + pure-JAX reference
# ----------------------------------------------------------------------------
def init_params(key, d_e, d_q, num_heads):
    HD = num_heads * d_q
    ks = jax.random.split(key, 8)
    return dict(
        wq=0.1 * jax.random.normal(ks[0], (d_e, HD), jnp.float32),
        bq=0.1 * jax.random.normal(ks[1], (1, HD), jnp.float32),
        wk=0.1 * jax.random.normal(ks[2], (d_e, HD), jnp.float32),
        bk=0.1 * jax.random.normal(ks[3], (1, HD), jnp.float32),
        wv=0.1 * jax.random.normal(ks[4], (d_e, HD), jnp.float32),
        bv=0.1 * jax.random.normal(ks[5], (1, HD), jnp.float32),
        wo=0.1 * jax.random.normal(ks[6], (HD, d_e), jnp.float32),
        bo=0.1 * jax.random.normal(ks[7], (1, d_e), jnp.float32),
        ln_g=jnp.ones((1, d_e), jnp.float32),
        ln_b=jnp.zeros((1, d_e), jnp.float32),
    )


def ref_mha(pre_q, pre_k, mask, p, H, dq):
    B, Lq, _ = pre_q.shape
    Lk = pre_k.shape[1]
    q = (pre_q @ p["wq"] + p["bq"]).reshape(B, Lq, H, dq).transpose(0, 2, 1, 3)
    k = (pre_k @ p["wk"] + p["bk"]).reshape(B, Lk, H, dq).transpose(0, 2, 1, 3)
    v = (pre_k @ p["wv"] + p["bv"]).reshape(B, Lk, H, dq).transpose(0, 2, 1, 3)
    s = jnp.einsum("bhqd,bhkd->bhqk", q, k) / math.sqrt(dq)
    if mask is not None:
        s = jnp.where(mask[:, None, :, :], -1e9, s)
    a = jax.nn.softmax(s, axis=-1)
    ctx = jnp.einsum("bhqk,bhkd->bhqd", a, v).transpose(0, 2, 1, 3).reshape(B, Lq, H * dq)
    y = pre_q + ctx @ p["wo"] + p["bo"]
    return _layernorm(y, p["ln_g"], p["ln_b"])


# ----------------------------------------------------------------------------
if __name__ == "__main__":
    # args.d_e=32, d_q=8, num_heads=4; cross-attention-like shapes Lq=8, Lk=16.
    B, Lq, Lk = 2, 8, 16
    d_e, d_q, num_heads = 32, 8, 4

    root = jax.random.PRNGKey(0)
    k_q, k_k, k_p = jax.random.split(root, 3)
    pre_q = jax.random.normal(k_q, (B, Lq, d_e), jnp.float32)
    pre_k = jax.random.normal(k_k, (B, Lk, d_e), jnp.float32)

    # Key-padding mask (True == masked): batch 0 keeps all 16 kv positions,
    # batch 1 masks the last 4.
    kv_len = jnp.array([Lk, 12])
    mask = jnp.broadcast_to(
        jnp.arange(Lk)[None, None, :] >= kv_len[:, None, None], (B, Lq, Lk))

    params = init_params(k_p, d_e, d_q, num_heads)

    out = multi_head_attn(pre_q, pre_k, params, mask, num_heads=num_heads, d_q=d_q)
    out = jax.block_until_ready(out)

    ref = ref_mha(pre_q, pre_k, mask, params, num_heads, d_q)
    assert out.shape == (B, Lq, d_e)
    assert jnp.allclose(out, ref, atol=1e-4, rtol=1e-4), "mismatch vs pure-JAX reference"

    print("KERNEL_OK")
</pallas_src>

<mosaic_0001>
module attributes {stable_mosaic.version = 11 : i64} {
  func.func @mha_kernel(%arg0: memref<16x32xf32, #tpu.memory_space<vmem>>, %arg1: memref<32x32xf32, #tpu.memory_space<vmem>>, %arg2: memref<2x8x16xf32, #tpu.memory_space<vmem>>, %arg3: memref<32x32xf32, #tpu.memory_space<vmem>>, %arg4: memref<1x32xf32, #tpu.memory_space<vmem>>, %arg5: memref<32x32xf32, #tpu.memory_space<vmem>>, %arg6: memref<1x32xf32, #tpu.memory_space<vmem>>, %arg7: memref<32x32xf32, #tpu.memory_space<vmem>>, %arg8: memref<1x32xf32, #tpu.memory_space<vmem>>, %arg9: memref<32x32xf32, #tpu.memory_space<vmem>>, %arg10: memref<1x32xf32, #tpu.memory_space<vmem>>, %arg11: memref<1x32xf32, #tpu.memory_space<vmem>>, %arg12: memref<1x32xf32, #tpu.memory_space<vmem>>, %arg13: memref<16x32xf32, #tpu.memory_space<vmem>>) attributes {dimension_semantics = [], scalar_prefetch = 0 : i64, scratch_operands = 0 : i64, tpu.core_type = #tpu.core_type<tc>} {
    %c0 = arith.constant 0 : index
    %c0_0 = arith.constant 0 : index
    %0 = vector.load %arg0[%c0, %c0_0] : memref<16x32xf32, #tpu.memory_space<vmem>>, vector<16x32xf32>
    %c0_1 = arith.constant 0 : index
    %c0_2 = arith.constant 0 : index
    %1 = vector.load %arg1[%c0_1, %c0_2] : memref<32x32xf32, #tpu.memory_space<vmem>>, vector<32x32xf32>
    %c0_3 = arith.constant 0 : index
    %c0_4 = arith.constant 0 : index
    %2 = vector.load %arg3[%c0_3, %c0_4] : memref<32x32xf32, #tpu.memory_space<vmem>>, vector<32x32xf32>
    %cst = arith.constant dense<0.000000e+00> : vector<16x32xf32>
    %3 = tpu.matmul %0, %2, %cst {dimension_numbers = #tpu.dot_dimension_numbers<[1], [0], [0], [1], [0, 0, 1, 1], [], []>} : vector<16x32xf32>, vector<32x32xf32>, vector<16x32xf32> -> vector<16x32xf32>
    %c0_5 = arith.constant 0 : index
    %c0_6 = arith.constant 0 : index
    %4 = vector.load %arg4[%c0_5, %c0_6] : memref<1x32xf32, #tpu.memory_space<vmem>>, vector<1x32xf32>
    %5 = vector.broadcast %4 : vector<1x32xf32> to vector<16x32xf32>
    %6 = arith.addf %3, %5 : vector<16x32xf32>
    %cst_7 = arith.constant 0.353553385 : f32
    %7 = vector.broadcast %cst_7 : f32 to vector<16x32xf32>
    %8 = arith.mulf %6, %7 : vector<16x32xf32>
    %c0_8 = arith.constant 0 : index
    %c0_9 = arith.constant 0 : index
    %9 = vector.load %arg5[%c0_8, %c0_9] : memref<32x32xf32, #tpu.memory_space<vmem>>, vector<32x32xf32>
    %cst_10 = arith.constant dense<0.000000e+00> : vector<32x32xf32>
    %10 = tpu.matmul %1, %9, %cst_10 {dimension_numbers = #tpu.dot_dimension_numbers<[1], [0], [0], [1], [0, 0, 1, 1], [], []>} : vector<32x32xf32>, vector<32x32xf32>, vector<32x32xf32> -> vector<32x32xf32>
    %c0_11 = arith.constant 0 : index
    %c0_12 = arith.constant 0 : index
    %11 = vector.load %arg6[%c0_11, %c0_12] : memref<1x32xf32, #tpu.memory_space<vmem>>, vector<1x32xf32>
    %12 = vector.broadcast %11 : vector<1x32xf32> to vector<32x32xf32>
    %13 = arith.addf %10, %12 : vector<32x32xf32>
    %c0_13 = arith.constant 0 : index
    %c0_14 = arith.constant 0 : index
    %14 = vector.load %arg7[%c0_13, %c0_14] : memref<32x32xf32, #tpu.memory_space<vmem>>, vector<32x32xf32>
    %cst_15 = arith.constant dense<0.000000e+00> : vector<32x32xf32>
    %15 = tpu.matmul %1, %14, %cst_15 {dimension_numbers = #tpu.dot_dimension_numbers<[1], [0], [0], [1], [0, 0, 1, 1], [], []>} : vector<32x32xf32>, vector<32x32xf32>, vector<32x32xf32> -> vector<32x32xf32>
    %c0_16 = arith.constant 0 : index
    %c0_17 = arith.constant 0 : index
    %16 = vector.load %arg8[%c0_16, %c0_17] : memref<1x32xf32, #tpu.memory_space<vmem>>, vector<1x32xf32>
    %17 = vector.broadcast %16 : vector<1x32xf32> to vector<32x32xf32>
    %18 = arith.addf %15, %17 : vector<32x32xf32>
    %c0_18 = arith.constant 0 : index
    %c0_19 = arith.constant 0 : index
    %c0_20 = arith.constant 0 : index
    %19 = vector.load %arg2[%c0_18, %c0_19, %c0_20] : memref<2x8x16xf32, #tpu.memory_space<vmem>>, vector<2x8x16xf32>
    %cst_21 = arith.constant 5.000000e-01 : f32
    %20 = vector.broadcast %cst_21 : f32 to vector<2x8x16xf32>
    %21 = arith.cmpf ogt, %19, %20 : vector<2x8x16xf32>
    %22 = vector.extract_strided_slice %8 {offsets = [0, 0], sizes = [16, 8], strides = [1, 1]} : vector<16x32xf32> to vector<16x8xf32>
    %23 = vector.shape_cast %22 : vector<16x8xf32> to vector<2x8x8xf32>
    %24 = vector.extract_strided_slice %13 {offsets = [0, 0], sizes = [32, 8], strides = [1, 1]} : vector<32x32xf32> to vector<32x8xf32>
    %25 = vector.shape_cast %24 : vector<32x8xf32> to vector<2x16x8xf32>
    %26 = vector.extract_strided_slice %18 {offsets = [0, 0], sizes = [32, 8], strides = [1, 1]} : vector<32x32xf32> to vector<32x8xf32>
    %27 = vector.shape_cast %26 : vector<32x8xf32> to vector<2x16x8xf32>
    "tpu.trace_start"() <{level = 10 : i32, message = "bqd,bkd->bqk"}> : () -> ()
    %cst_22 = arith.constant dense<0.000000e+00> : vector<2x8x16xf32>
    %28 = tpu.matmul %23, %25, %cst_22 {dimension_numbers = #tpu.dot_dimension_numbers<[2], [2], [1], [1], [0, 0, 0, 1, 1, 1], [0], [0]>} : vector<2x8x8xf32>, vector<2x16x8xf32>, vector<2x8x16xf32> -> vector<2x8x16xf32>
    %cst_23 = arith.constant -1.000000e+09 : f32
    "tpu.trace_stop"() : () -> ()
    %29 = vector.broadcast %cst_23 : f32 to vector<2x8x16xf32>
    %30 = arith.select %21, %29, %28 : vector<2x8x16xi1>, vector<2x8x16xf32>
    %cst_24 = arith.constant dense<0xFF800000> : vector<2x8xf32>
    %31 = vector.multi_reduction <maximumf>, %30, %cst_24 [2] : vector<2x8x16xf32> to vector<2x8xf32>
    %32 = vector.shape_cast %31 : vector<2x8xf32> to vector<2x8x1xf32>
    %33 = vector.broadcast %32 : vector<2x8x1xf32> to vector<2x8x16xf32>
    %34 = arith.subf %30, %33 : vector<2x8x16xf32>
    %35 = math.exp %34 : vector<2x8x16xf32>
    %cst_25 = arith.constant dense<0.000000e+00> : vector<2x8xf32>
    %36 = vector.multi_reduction <add>, %35, %cst_25 [2] : vector<2x8x16xf32> to vector<2x8xf32>
    %37 = vector.shape_cast %36 : vector<2x8xf32> to vector<2x8x1xf32>
    %38 = tpu.reciprocal %37 : vector<2x8x1xf32> -> vector<2x8x1xf32>
    %39 = vector.broadcast %38 : vector<2x8x1xf32> to vector<2x8x16xf32>
    %40 = arith.mulf %35, %39 : vector<2x8x16xf32>
    "tpu.trace_start"() <{level = 10 : i32, message = "bqk,bkd->bqd"}> : () -> ()
    %cst_26 = arith.constant dense<0.000000e+00> : vector<2x8x8xf32>
    %41 = tpu.matmul %40, %27, %cst_26 {dimension_numbers = #tpu.dot_dimension_numbers<[2], [1], [1], [2], [0, 0, 0, 1, 1, 2], [0], [0]>} : vector<2x8x16xf32>, vector<2x16x8xf32>, vector<2x8x8xf32> -> vector<2x8x8xf32>
    "tpu.trace_stop"() : () -> ()
    %42 = vector.shape_cast %41 : vector<2x8x8xf32> to vector<16x8xf32>
    %43 = vector.extract_strided_slice %8 {offsets = [0, 8], sizes = [16, 8], strides = [1, 1]} : vector<16x32xf32> to vector<16x8xf32>
    %44 = vector.shape_cast %43 : vector<16x8xf32> to vector<2x8x8xf32>
    %45 = vector.extract_strided_slice %13 {offsets = [0, 8], sizes = [32, 8], strides = [1, 1]} : vector<32x32xf32> to vector<32x8xf32>
    %46 = vector.shape_cast %45 : vector<32x8xf32> to vector<2x16x8xf32>
    %47 = vector.extract_strided_slice %18 {offsets = [0, 8], sizes = [32, 8], strides = [1, 1]} : vector<32x32xf32> to vector<32x8xf32>
    %48 = vector.shape_cast %47 : vector<32x8xf32> to vector<2x16x8xf32>
    "tpu.trace_start"() <{level = 10 : i32, message = "bqd,bkd->bqk"}> : () -> ()
    %cst_27 = arith.constant dense<0.000000e+00> : vector<2x8x16xf32>
    %49 = tpu.matmul %44, %46, %cst_27 {dimension_numbers = #tpu.dot_dimension_numbers<[2], [2], [1], [1], [0, 0, 0, 1, 1, 1], [0], [0]>} : vector<2x8x8xf32>, vector<2x16x8xf32>, vector<2x8x16xf32> -> vector<2x8x16xf32>
    %cst_28 = arith.constant -1.000000e+09 : f32
    "tpu.trace_stop"() : () -> ()
    %50 = vector.broadcast %cst_28 : f32 to vector<2x8x16xf32>
    %51 = arith.select %21, %50, %49 : vector<2x8x16xi1>, vector<2x8x16xf32>
    %cst_29 = arith.constant dense<0xFF800000> : vector<2x8xf32>
    %52 = vector.multi_reduction <maximumf>, %51, %cst_29 [2] : vector<2x8x16xf32> to vector<2x8xf32>
    %53 = vector.shape_cast %52 : vector<2x8xf32> to vector<2x8x1xf32>
    %54 = vector.broadcast %53 : vector<2x8x1xf32> to vector<2x8x16xf32>
    %55 = arith.subf %51, %54 : vector<2x8x16xf32>
    %56 = math.exp %55 : vector<2x8x16xf32>
    %cst_30 = arith.constant dense<0.000000e+00> : vector<2x8xf32>
    %57 = vector.multi_reduction <add>, %56, %cst_30 [2] : vector<2x8x16xf32> to vector<2x8xf32>
    %58 = vector.shape_cast %57 : vector<2x8xf32> to vector<2x8x1xf32>
    %59 = tpu.reciprocal %58 : vector<2x8x1xf32> -> vector<2x8x1xf32>
    %60 = vector.broadcast %59 : vector<2x8x1xf32> to vector<2x8x16xf32>
    %61 = arith.mulf %56, %60 : vector<2x8x16xf32>
    "tpu.trace_start"() <{level = 10 : i32, message = "bqk,bkd->bqd"}> : () -> ()
    %cst_31 = arith.constant dense<0.000000e+00> : vector<2x8x8xf32>
    %62 = tpu.matmul %61, %48, %cst_31 {dimension_numbers = #tpu.dot_dimension_numbers<[2], [1], [1], [2], [0, 0, 0, 1, 1, 2], [0], [0]>} : vector<2x8x16xf32>, vector<2x16x8xf32>, vector<2x8x8xf32> -> vector<2x8x8xf32>
    "tpu.trace_stop"() : () -> ()
    %63 = vector.shape_cast %62 : vector<2x8x8xf32> to vector<16x8xf32>
    %64 = vector.extract_strided_slice %8 {offsets = [0, 16], sizes = [16, 8], strides = [1, 1]} : vector<16x32xf32> to vector<16x8xf32>
    %65 = vector.shape_cast %64 : vector<16x8xf32> to vector<2x8x8xf32>
    %66 = vector.extract_strided_slice %13 {offsets = [0, 16], sizes = [32, 8], strides = [1, 1]} : vector<32x32xf32> to vector<32x8xf32>
    %67 = vector.shape_cast %66 : vector<32x8xf32> to vector<2x16x8xf32>
    %68 = vector.extract_strided_slice %18 {offsets = [0, 16], sizes = [32, 8], strides = [1, 1]} : vector<32x32xf32> to vector<32x8xf32>
    %69 = vector.shape_cast %68 : vector<32x8xf32> to vector<2x16x8xf32>
    "tpu.trace_start"() <{level = 10 : i32, message = "bqd,bkd->bqk"}> : () -> ()
    %cst_32 = arith.constant dense<0.000000e+00> : vector<2x8x16xf32>
    %70 = tpu.matmul %65, %67, %cst_32 {dimension_numbers = #tpu.dot_dimension_numbers<[2], [2], [1], [1], [0, 0, 0, 1, 1, 1], [0], [0]>} : vector<2x8x8xf32>, vector<2x16x8xf32>, vector<2x8x16xf32> -> vector<2x8x16xf32>
    %cst_33 = arith.constant -1.000000e+09 : f32
    "tpu.trace_stop"() : () -> ()
    %71 = vector.broadcast %cst_33 : f32 to vector<2x8x16xf32>
    %72 = arith.select %21, %71, %70 : vector<2x8x16xi1>, vector<2x8x16xf32>
    %cst_34 = arith.constant dense<0xFF800000> : vector<2x8xf32>
    %73 = vector.multi_reduction <maximumf>, %72, %cst_34 [2] : vector<2x8x16xf32> to vector<2x8xf32>
    %74 = vector.shape_cast %73 : vector<2x8xf32> to vector<2x8x1xf32>
    %75 = vector.broadcast %74 : vector<2x8x1xf32> to vector<2x8x16xf32>
    %76 = arith.subf %72, %75 : vector<2x8x16xf32>
    %77 = math.exp %76 : vector<2x8x16xf32>
    %cst_35 = arith.constant dense<0.000000e+00> : vector<2x8xf32>
    %78 = vector.multi_reduction <add>, %77, %cst_35 [2] : vector<2x8x16xf32> to vector<2x8xf32>
    %79 = vector.shape_cast %78 : vector<2x8xf32> to vector<2x8x1xf32>
    %80 = tpu.reciprocal %79 : vector<2x8x1xf32> -> vector<2x8x1xf32>
    %81 = vector.broadcast %80 : vector<2x8x1xf32> to vector<2x8x16xf32>
    %82 = arith.mulf %77, %81 : vector<2x8x16xf32>
    "tpu.trace_start"() <{level = 10 : i32, message = "bqk,bkd->bqd"}> : () -> ()
    %cst_36 = arith.constant dense<0.000000e+00> : vector<2x8x8xf32>
    %83 = tpu.matmul %82, %69, %cst_36 {dimension_numbers = #tpu.dot_dimension_numbers<[2], [1], [1], [2], [0, 0, 0, 1, 1, 2], [0], [0]>} : vector<2x8x16xf32>, vector<2x16x8xf32>, vector<2x8x8xf32> -> vector<2x8x8xf32>
    "tpu.trace_stop"() : () -> ()
    %84 = vector.shape_cast %83 : vector<2x8x8xf32> to vector<16x8xf32>
    %85 = vector.extract_strided_slice %8 {offsets = [0, 24], sizes = [16, 8], strides = [1, 1]} : vector<16x32xf32> to vector<16x8xf32>
    %86 = vector.shape_cast %85 : vector<16x8xf32> to vector<2x8x8xf32>
    %87 = vector.extract_strided_slice %13 {offsets = [0, 24], sizes = [32, 8], strides = [1, 1]} : vector<32x32xf32> to vector<32x8xf32>
    %88 = vector.shape_cast %87 : vector<32x8xf32> to vector<2x16x8xf32>
    %89 = vector.extract_strided_slice %18 {offsets = [0, 24], sizes = [32, 8], strides = [1, 1]} : vector<32x32xf32> to vector<32x8xf32>
    %90 = vector.shape_cast %89 : vector<32x8xf32> to vector<2x16x8xf32>
    "tpu.trace_start"() <{level = 10 : i32, message = "bqd,bkd->bqk"}> : () -> ()
    %cst_37 = arith.constant dense<0.000000e+00> : vector<2x8x16xf32>
    %91 = tpu.matmul %86, %88, %cst_37 {dimension_numbers = #tpu.dot_dimension_numbers<[2], [2], [1], [1], [0, 0, 0, 1, 1, 1], [0], [0]>} : vector<2x8x8xf32>, vector<2x16x8xf32>, vector<2x8x16xf32> -> vector<2x8x16xf32>
    %cst_38 = arith.constant -1.000000e+09 : f32
    "tpu.trace_stop"() : () -> ()
    %92 = vector.broadcast %cst_38 : f32 to vector<2x8x16xf32>
    %93 = arith.select %21, %92, %91 : vector<2x8x16xi1>, vector<2x8x16xf32>
    %cst_39 = arith.constant dense<0xFF800000> : vector<2x8xf32>
    %94 = vector.multi_reduction <maximumf>, %93, %cst_39 [2] : vector<2x8x16xf32> to vector<2x8xf32>
    %95 = vector.shape_cast %94 : vector<2x8xf32> to vector<2x8x1xf32>
    %96 = vector.broadcast %95 : vector<2x8x1xf32> to vector<2x8x16xf32>
    %97 = arith.subf %93, %96 : vector<2x8x16xf32>
    %98 = math.exp %97 : vector<2x8x16xf32>
    %cst_40 = arith.constant dense<0.000000e+00> : vector<2x8xf32>
    %99 = vector.multi_reduction <add>, %98, %cst_40 [2] : vector<2x8x16xf32> to vector<2x8xf32>
    %100 = vector.shape_cast %99 : vector<2x8xf32> to vector<2x8x1xf32>
    %101 = tpu.reciprocal %100 : vector<2x8x1xf32> -> vector<2x8x1xf32>
    %102 = vector.broadcast %101 : vector<2x8x1xf32> to vector<2x8x16xf32>
    %103 = arith.mulf %98, %102 : vector<2x8x16xf32>
    "tpu.trace_start"() <{level = 10 : i32, message = "bqk,bkd->bqd"}> : () -> ()
    %cst_41 = arith.constant dense<0.000000e+00> : vector<2x8x8xf32>
    %104 = tpu.matmul %103, %90, %cst_41 {dimension_numbers = #tpu.dot_dimension_numbers<[2], [1], [1], [2], [0, 0, 0, 1, 1, 2], [0], [0]>} : vector<2x8x16xf32>, vector<2x16x8xf32>, vector<2x8x8xf32> -> vector<2x8x8xf32>
    "tpu.trace_stop"() : () -> ()
    %105 = vector.shape_cast %104 : vector<2x8x8xf32> to vector<16x8xf32>
    %106 = tpu.concatenate %42, %63, %84, %105 in 1 : vector<16x8xf32>, vector<16x8xf32>, vector<16x8xf32>, vector<16x8xf32> -> vector<16x32xf32>
    %c0_42 = arith.constant 0 : index
    %c0_43 = arith.constant 0 : index
    %107 = vector.load %arg9[%c0_42, %c0_43] : memref<32x32xf32, #tpu.memory_space<vmem>>, vector<32x32xf32>
    %cst_44 = arith.constant dense<0.000000e+00> : vector<16x32xf32>
    %108 = tpu.matmul %106, %107, %cst_44 {dimension_numbers = #tpu.dot_dimension_numbers<[1], [0], [0], [1], [0, 0, 1, 1], [], []>} : vector<16x32xf32>, vector<32x32xf32>, vector<16x32xf32> -> vector<16x32xf32>
    %c0_45 = arith.constant 0 : index
    %c0_46 = arith.constant 0 : index
    %109 = vector.load %arg10[%c0_45, %c0_46] : memref<1x32xf32, #tpu.memory_space<vmem>>, vector<1x32xf32>
    %110 = vector.broadcast %109 : vector<1x32xf32> to vector<16x32xf32>
    %111 = arith.addf %108, %110 : vector<16x32xf32>
    %112 = arith.addf %0, %111 : vector<16x32xf32>
    %c0_47 = arith.constant 0 : index
    %c0_48 = arith.constant 0 : index
    %113 = vector.load %arg11[%c0_47, %c0_48] : memref<1x32xf32, #tpu.memory_space<vmem>>, vector<1x32xf32>
    %c0_49 = arith.constant 0 : index
    %c0_50 = arith.constant 0 : index
    %114 = vector.load %arg12[%c0_49, %c0_50] : memref<1x32xf32, #tpu.memory_space<vmem>>, vector<1x32xf32>
    %cst_51 = arith.constant dense<0.000000e+00> : vector<16xf32>
    %115 = vector.multi_reduction <add>, %112, %cst_51 [1] : vector<16x32xf32> to vector<16xf32>
    %116 = vector.shape_cast %115 : vector<16xf32> to vector<16x1xf32>
    %cst_52 = arith.constant 3.200000e+01 : f32
    %117 = vector.broadcast %cst_52 : f32 to vector<16x1xf32>
    %118 = arith.divf %116, %117 : vector<16x1xf32>
    %119 = vector.broadcast %118 : vector<16x1xf32> to vector<16x32xf32>
    %120 = arith.subf %112, %119 : vector<16x32xf32>
    %121 = arith.mulf %120, %120 : vector<16x32xf32>
    %cst_53 = arith.constant dense<0.000000e+00> : vector<16xf32>
    %122 = vector.multi_reduction <add>, %121, %cst_53 [1] : vector<16x32xf32> to vector<16xf32>
    %123 = vector.shape_cast %122 : vector<16xf32> to vector<16x1xf32>
    %cst_54 = arith.constant 3.200000e+01 : f32
    %124 = vector.broadcast %cst_54 : f32 to vector<16x1xf32>
    %125 = arith.divf %123, %124 : vector<16x1xf32>
    %126 = vector.broadcast %118 : vector<16x1xf32> to vector<16x32xf32>
    %127 = arith.subf %112, %126 : vector<16x32xf32>
    %cst_55 = arith.constant 9.99999974E-6 : f32
    %128 = vector.broadcast %cst_55 : f32 to vector<16x1xf32>
    %129 = arith.addf %125, %128 : vector<16x1xf32>
    %130 = math.rsqrt %129 : vector<16x1xf32>
    %131 = vector.broadcast %130 : vector<16x1xf32> to vector<16x32xf32>
    %132 = arith.mulf %127, %131 : vector<16x32xf32>
    %133 = vector.broadcast %113 : vector<1x32xf32> to vector<16x32xf32>
    %134 = arith.mulf %132, %133 : vector<16x32xf32>
    %135 = vector.broadcast %114 : vector<1x32xf32> to vector<16x32xf32>
    %136 = arith.addf %134, %135 : vector<16x32xf32>
    %c0_56 = arith.constant 0 : index
    %c0_57 = arith.constant 0 : index
    %137 = vector.load %arg13[%c0_56, %c0_57] : memref<16x32xf32, #tpu.memory_space<vmem>>, vector<16x32xf32>
    tpu.vector_store %arg13[%c0_56, %c0_57], %136 {strides = array<i32>} : memref<16x32xf32, #tpu.memory_space<vmem>>, vector<16x32xf32>,
    return
  }
}

</mosaic_0001>

<llo_original>
// kernel: tpu_custom_call.1
$region0: #{tpu_custom_call.1}
  #allocation0 [shape = 'u32[]', space=smem, size = 0x4, offset = 0x4, fixed_abs, tag = 'smem constant byte address 0x4 - core index']
  #allocation1 [shape = 'u32[144,128]{1,0:T(1,128)}', space=vmem, size = 0x12000, scoped, tag = 'internal scratch']
  %s0 = inlined_call_operand.hbm [shape: f32[16,32], index: 0, kind: input, shape index: {}]
  %s1 = inlined_call_operand.hbm [shape: f32[32,32], index: 1, kind: input, shape index: {}]
  %s2 = inlined_call_operand.hbm [shape: f32[2,8,16], index: 2, kind: input, shape index: {}]
  %s3 = inlined_call_operand.hbm [shape: f32[32,32], index: 3, kind: input, shape index: {}]
  %s4 = inlined_call_operand.vmem [shape: f32[1,32], index: 4, kind: input, shape index: {}]
  %s5 = inlined_call_operand.hbm [shape: f32[32,32], index: 5, kind: input, shape index: {}]
  %s6 = inlined_call_operand.vmem [shape: f32[1,32], index: 6, kind: input, shape index: {}]
  %s7 = inlined_call_operand.hbm [shape: f32[32,32], index: 7, kind: input, shape index: {}]
  %s8 = inlined_call_operand.hbm [shape: f32[1,32], index: 8, kind: input, shape index: {}]
  %s9 = inlined_call_operand.vmem [shape: f32[32,32], index: 9, kind: input, shape index: {}]
  %s10 = inlined_call_operand.vmem [shape: f32[1,32], index: 10, kind: input, shape index: {}]
  %s11 = inlined_call_operand.vmem [shape: f32[1,32], index: 11, kind: input, shape index: {}]
  %s12 = inlined_call_operand.vmem [shape: f32[1,32], index: 12, kind: input, shape index: {}]
  %s13 = inlined_call_operand.hbm [shape: f32[16,32], index: 13, kind: output, shape index: {}]
  %s14 = sld [smem:[#allocation0]]
  $region90: #{tpu_custom_call.1} parent=0
    _
  %s16 = ssub.s32 1, %s14
  %s17 = scalar_select 0, %s16, %s14
  $region1: #{tpu_custom_call.1} parent=0
    #allocation2 [shape = 'u8[8192]{0}', space=vmem, size = 0x2000, scoped, tag = 'input window, operand 0, single buffered']
    #allocation3 [shape = 's32[1]{0}', space=sflag, size = 0x4, scoped, tag = 'scoped memory for tpu_custom_call.1']
    #allocation4 [shape = 's32[1]{0}', space=sflag, size = 0x4, scoped, tag = 'scoped memory for tpu_custom_call.1']
    #allocation5 [shape = 'u8[16384]{0}', space=vmem, size = 0x4000, scoped, tag = 'input window, operand 1, single buffered']
    #allocation6 [shape = 's32[1]{0}', space=sflag, size = 0x4, scoped, tag = 'scoped memory for tpu_custom_call.1']
    #allocation7 [shape = 'u8[8192]{0}', space=vmem, size = 0x2000, scoped, tag = 'input window, operand 2, single buffered']
    #allocation8 [shape = 'u8[16384]{0}', space=vmem, size = 0x4000, scoped, tag = 'input window, operand 3, single buffered']
    #allocation9 [shape = 's32[1]{0}', space=sflag, size = 0x4, scoped, tag = 'scoped memory for tpu_custom_call.1']
    #allocation10 [shape = 'u8[16384]{0}', space=vmem, size = 0x4000, scoped, tag = 'input window, operand 5, single buffered']
    #allocation11 [shape = 'u8[16384]{0}', space=vmem, size = 0x4000, scoped, tag = 'input window, operand 7, single buffered']
    #allocation12 [shape = 's32[1]{0}', space=sflag, size = 0x4, scoped, tag = 'scoped memory for tpu_custom_call.1']
    #allocation13 [shape = 'u8[512]{0}', space=vmem, size = 0x400, scoped, tag = 'input window, operand 8, single buffered']
    #allocation14 [shape = 'u8[8192]{0}', space=vmem, size = 0x2000, scoped, tag = 'output window, operand 0, single buffered']
    %18 = vsyncpa [#allocation3], 0
    %19 = vsyncpa [#allocation6], 0
    %20 = vsyncpa [#allocation9], 0
    %21 = vsyncpa [#allocation12], 0
    %22 = vsyncpa [#allocation4], 0
    // Predicated region
    $region2: #{tpu_custom_call.1} parent=1 // pred_check
      _
    $region3: #{tpu_custom_call.1} parent=1 // pred_check_branch
      %24 = sbr.rel (0) target = $region5
    $region4: #{tpu_custom_call.1} parent=1 // pred_region
      %s26 = ssub.s32 256, 256
      %27 = vsyncadd [#allocation3], %s26
      %s28 = sshll.u32 [#allocation2], 4
      %s29 = int_to_ptr.vmem [resolvable:$true] %s28
      %34 = dma.hbm_to_vmem [thread:$0]  %s0, 256, %s29, [#allocation3], 128, 128, 8
    $region5: #{tpu_custom_call.1} parent=1 // pred_fallthru
      _
    // Predicated region
    $region6: #{tpu_custom_call.1} parent=1 // pred_check
      _
    $region7: #{tpu_custom_call.1} parent=1 // pred_check_branch
      %36 = sbr.rel (0) target = $region9
    $region8: #{tpu_custom_call.1} parent=1 // pred_region
      %s38 = ssub.s32 512, 512
      %39 = vsyncadd [#allocation6], %s38
      %s40 = sshll.u32 [#allocation5], 4
      %s41 = int_to_ptr.vmem [resolvable:$true] %s40
      %46 = dma.hbm_to_vmem [thread:$0]  %s1, 512, %s41, [#allocation6], 128, 128, 8
    $region9: #{tpu_custom_call.1} parent=1 // pred_fallthru
      _
    // Predicated region
    $region10: #{tpu_custom_call.1} parent=1 // pred_check
      _
    $region11: #{tpu_custom_call.1} parent=1 // pred_check_branch
      %48 = sbr.rel (0) target = $region13
    $region12: #{tpu_custom_call.1} parent=1 // pred_region
      %s50 = ssub.s32 256, 256
      %51 = vsyncadd [#allocation6], %s50
      %s52 = sshll.u32 [#allocation7], 4
      %s53 = int_to_ptr.vmem [resolvable:$true] %s52
      %58 = dma.hbm_to_vmem [thread:$0]  %s2, 256, %s53, [#allocation6], 128, 128, 8
    $region13: #{tpu_custom_call.1} parent=1 // pred_fallthru
      _
    // Predicated region
    $region14: #{tpu_custom_call.1} parent=1 // pred_check
      _
    $region15: #{tpu_custom_call.1} parent=1 // pred_check_branch
      %60 = sbr.rel (0) target = $region17
    $region16: #{tpu_custom_call.1} parent=1 // pred_region
      %s62 = ssub.s32 512, 512
      %63 = vsyncadd [#allocation9], %s62
      %s64 = sshll.u32 [#allocation8], 4
      %s65 = int_to_ptr.vmem [resolvable:$true] %s64
      %70 = dma.hbm_to_vmem [thread:$0]  %s3, 512, %s65, [#allocation9], 128, 128, 8
    $region17: #{tpu_custom_call.1} parent=1 // pred_fallthru
      _
    // Predicated region
    $region18: #{tpu_custom_call.1} parent=1 // pred_check
      _
    $region19: #{tpu_custom_call.1} parent=1 // pred_check_branch
      %72 = sbr.rel (0) target = $region21
    $region20: #{tpu_custom_call.1} parent=1 // pred_region
      _
    $region21: #{tpu_custom_call.1} parent=1 // pred_fallthru
      _
    // Predicated region
    $region22: #{tpu_custom_call.1} parent=1 // pred_check
      _
    $region23: #{tpu_custom_call.1} parent=1 // pred_check_branch
      %74 = sbr.rel (0) target = $region25
    $region24: #{tpu_custom_call.1} parent=1 // pred_region
      %s76 = ssub.s32 512, 512
      %77 = vsyncadd [#allocation9], %s76
      %s78 = sshll.u32 [#allocation10], 4
      %s79 = int_to_ptr.vmem [resolvable:$true] %s78
      %84 = dma.hbm_to_vmem [thread:$0]  %s5, 512, %s79, [#allocation9], 128, 128, 8
    $region25: #{tpu_custom_call.1} parent=1 // pred_fallthru
      _
    // Predicated region
    $region26: #{tpu_custom_call.1} parent=1 // pred_check
      _
    $region27: #{tpu_custom_call.1} parent=1 // pred_check_branch
      %86 = sbr.rel (0) target = $region29
    $region28: #{tpu_custom_call.1} parent=1 // pred_region
      _
    $region29: #{tpu_custom_call.1} parent=1 // pred_fallthru
      _
    // Predicated region
    $region30: #{tpu_custom_call.1} parent=1 // pred_check
      _
    $region31: #{tpu_custom_call.1} parent=1 // pred_check_branch
      %88 = sbr.rel (0) target = $region33
    $region32: #{tpu_custom_call.1} parent=1 // pred_region
      %s90 = ssub.s32 512, 512
      %91 = vsyncadd [#allocation12], %s90
      %s92 = sshll.u32 [#allocation11], 4
      %s93 = int_to_ptr.vmem [resolvable:$true] %s92
      %98 = dma.hbm_to_vmem [thread:$0]  %s7, 512, %s93, [#allocation12], 128, 128, 8
    $region33: #{tpu_custom_call.1} parent=1 // pred_fallthru
      _
    // Predicated region
    $region34: #{tpu_custom_call.1} parent=1 // pred_check
      _
    $region35: #{tpu_custom_call.1} parent=1 // pred_check_branch
      %100 = sbr.rel (0) target = $region37
    $region36: #{tpu_custom_call.1} parent=1 // pred_region
      %s102 = ssub.s32 16, 16
      %103 = vsyncadd [#allocation12], %s102
      %s105 = sshll.u32 [#allocation13], 4
      %s106 = int_to_ptr.vmem [resolvable:$true] %s105
      %108 = dma.hbm_to_vmem [thread:$0]  %s8, 16, %s106, [#allocation12]
    $region37: #{tpu_custom_call.1} parent=1 // pred_fallthru
      _
    // Predicated region
    $region38: #{tpu_custom_call.1} parent=1 // pred_check
      _
    $region39: #{tpu_custom_call.1} parent=1 // pred_check_branch
      %110 = sbr.rel (0) target = $region41
    $region40: #{tpu_custom_call.1} parent=1 // pred_region
      _
    $region41: #{tpu_custom_call.1} parent=1 // pred_fallthru
      _
    // Predicated region
    $region42: #{tpu_custom_call.1} parent=1 // pred_check
      _
    $region43: #{tpu_custom_call.1} parent=1 // pred_check_branch
      %112 = sbr.rel (0) target = $region45
    $region44: #{tpu_custom_call.1} parent=1 // pred_region
      _
    $region45: #{tpu_custom_call.1} parent=1 // pred_fallthru
      _
    // Predicated region
    $region46: #{tpu_custom_call.1} parent=1 // pred_check
      _
    $region47: #{tpu_custom_call.1} parent=1 // pred_check_branch
      %114 = sbr.rel (0) target = $region49
    $region48: #{tpu_custom_call.1} parent=1 // pred_region
      _
    $region49: #{tpu_custom_call.1} parent=1 // pred_fallthru
      _
    // Predicated region
    $region50: #{tpu_custom_call.1} parent=1 // pred_check
      _
    $region51: #{tpu_custom_call.1} parent=1 // pred_check_branch
      %116 = sbr.rel (0) target = $region53
    $region52: #{tpu_custom_call.1} parent=1 // pred_region
      _
    $region53: #{tpu_custom_call.1} parent=1 // pred_fallthru
      _
    // Predicated region
    $region54: #{tpu_custom_call.1} parent=1 // pred_check
      _
    $region55: #{tpu_custom_call.1} parent=1 // pred_check_branch
      %118 = sbr.rel (0) target = $region57
    $region56: #{tpu_custom_call.1} parent=1 // pred_region
      %119 = dma.done [#allocation3], 256
    $region57: #{tpu_custom_call.1} parent=1 // pred_fallthru
      _
    // Predicated region
    $region58: #{tpu_custom_call.1} parent=1 // pred_check
      _
    $region59: #{tpu_custom_call.1} parent=1 // pred_check_branch
      %121 = sbr.rel (0) target = $region61
    $region60: #{tpu_custom_call.1} parent=1 // pred_region
      %122 = dma.done [#allocation6], 512
    $region61: #{tpu_custom_call.1} parent=1 // pred_fallthru
      _
    // Predicated region
    $region62: #{tpu_custom_call.1} parent=1 // pred_check
      _
    $region63: #{tpu_custom_call.1} parent=1 // pred_check_branch
      %124 = sbr.rel (0) target = $region65
    $region64: #{tpu_custom_call.1} parent=1 // pred_region
      %125 = dma.done [#allocation6], 256
    $region65: #{tpu_custom_call.1} parent=1 // pred_fallthru
      _
    // Predicated region
    $region66: #{tpu_custom_call.1} parent=1 // pred_check
      _
    $region67: #{tpu_custom_call.1} parent=1 // pred_check_branch
      %127 = sbr.rel (0) target = $region69
    $region68: #{tpu_custom_call.1} parent=1 // pred_region
      %128 = dma.done [#allocation9], 512
    $region69: #{tpu_custom_call.1} parent=1 // pred_fallthru
      _
    // Predicated region
    $region70: #{tpu_custom_call.1} parent=1 // pred_check
      _
    $region71: #{tpu_custom_call.1} parent=1 // pred_check_branch
      %130 = sbr.rel (0) target = $region73
    $region72: #{tpu_custom_call.1} parent=1 // pred_region
      %131 = dma.done [#allocation9], 512
    $region73: #{tpu_custom_call.1} parent=1 // pred_fallthru
      _
    // Predicated region
    $region74: #{tpu_custom_call.1} parent=1 // pred_check
      _
    $region75: #{tpu_custom_call.1} parent=1 // pred_check_branch
      %133 = sbr.rel (0) target = $region77
    $region76: #{tpu_custom_call.1} parent=1 // pred_region
      %134 = dma.done [#allocation12], 512
    $region77: #{tpu_custom_call.1} parent=1 // pred_fallthru
      _
    // Predicated region
    $region78: #{tpu_custom_call.1} parent=1 // pred_check
      _
    $region79: #{tpu_custom_call.1} parent=1 // pred_check_branch
      %136 = sbr.rel (0) target = $region81
    $region80: #{tpu_custom_call.1} parent=1 // pred_region
      %137 = dma.done [#allocation12], 16
    $region81: #{tpu_custom_call.1} parent=1 // pred_fallthru
      _
    %v138 = vld [vmem:[#allocation2] sm:$0xff]
    %v139 = vld [vmem:[#allocation2 + $0x8] sm:$0xff]
    %v140 = vld [vmem:[#allocation5] sm:$0xff]
    %v141 = vld [vmem:[#allocation5 + $0x8] sm:$0xff]
    %v142 = vld [vmem:[#allocation5 + $0x10] sm:$0xff]
    %v143 = vld [vmem:[#allocation5 + $0x18] sm:$0xff]
    %v144 = vld [vmem:[#allocation8] sm:$0xff]
    %v145 = vld [vmem:[#allocation8 + $0x8] sm:$0xff]
    %v146 = vld [vmem:[#allocation8 + $0x10] sm:$0xff]
    %v147 = vld [vmem:[#allocation8 + $0x18] sm:$0xff]
    %v148 = vld [vmem:[%s4] sm:$0x1]
    %v150 = vlaneseq
    %v151 = vshrl.u32 %v150, 7
    %v152 = vsub.s32 0, %v151
    %v153 = vrot.slane %v148, %v152
    %vm155 = vcmask 261120
    %v157 = vsel %vm155, %v138, 0
    %v160 = vsel %vm155, %v139, 0
    %162 = vmatprep.subr.mxu0 0.0
    %163 = vmatpush1.msra.mxu0 %v144
    %164 = vmatprep.subr.mxu0 0.0
    %165 = vmatpush1.msra.mxu0 %v145
    %166 = vmatprep.subr.mxu0 0.0
    %167 = vmatpush1.msra.mxu0 %v146
    %168 = vmatprep.subr.mxu0 0.0
    %169 = vmatpush1.msra.mxu0 %v147
    %170 = vmatprep.subr.mxu0 0.0
    %171 = vmatpush1.msra.mxu0 0.0
    %172 = vmatprep.subr.mxu0 0.0
    %173 = vmatpush1.msra.mxu0 0.0
    %174 = vmatprep.subr.mxu0 0.0
    %175 = vmatpush1.msra.mxu0 0.0
    %176 = vmatprep.subr.mxu0 0.0
    %177 = vmatpush1.msra.mxu0 0.0
    %178 = vmatprep.subr.mxu0 0.0
    %179 = vmatpush1.msra.mxu0 0.0
    %180 = vmatprep.subr.mxu0 0.0
    %181 = vmatpush1.msra.mxu0 0.0
    %182 = vmatprep.subr.mxu0 0.0
    %183 = vmatpush1.msra.mxu0 0.0
    %184 = vmatprep.subr.mxu0 0.0
    %185 = vmatpush1.msra.mxu0 0.0
    %186 = vmatprep.subr.mxu0 0.0
    %187 = vmatpush1.msra.mxu0 0.0
    %188 = vmatprep.subr.mxu0 0.0
    %189 = vmatpush1.msra.mxu0 0.0
    %190 = vmatprep.subr.mxu0 0.0
    %191 = vmatpush1.msra.mxu0 0.0
    %192 = vmatprep.subr.mxu0 0.0
    %193 = vmatpush1.msra.mxu0 0.0
    %194 = vmatprep.subr.mxu0 0.0
    %195 = vmatpush1.msra.mxu0 0.0
    %196 = vmatprep.subr.mxu0 0.0
    %197 = vmatpush1.msra.mxu0 0.0
    %198 = vmatprep.subr.mxu0 0.0
    %199 = vmatpush1.msra.mxu0 0.0
    %200 = vmatprep.subr.mxu0 0.0
    %201 = vmatpush1.msra.mxu0 0.0
    %202 = vmatprep.subr.mxu0 0.0
    %203 = vmatpush1.msra.mxu0 0.0
    %204 = vmatprep.subr.mxu0 0.0
    %205 = vmatpush1.msra.mxu0 0.0
    %206 = vmatprep.subr.mxu0 0.0
    %207 = vmatpush1.msra.mxu0 0.0
    %208 = vmatprep.subr.mxu0 0.0
    %209 = vmatpush1.msra.mxu0 0.0
    %210 = vmatprep.subr.mxu0 0.0
    %211 = vmatpush1.msra.mxu0 0.0
    %212 = vmatprep.subr.mxu0 0.0
    %213 = vmatpush1.msra.mxu0 0.0
    %214 = vmatprep.subr.mxu0 0.0
    %215 = vmatpush1.msra.mxu0 0.0
    %216 = vmatprep.subr.mxu0 0.0
    %217 = vmatpush1.msra.mxu0 0.0
    %218 = vmatprep.subr.mxu0 0.0
    %219 = vmatpush1.msra.mxu0 0.0
    %220 = vmatprep.subr.mxu0 0.0
    %221 = vmatpush1.msra.mxu0 0.0
    %222 = vmatprep.subr.mxu0 0.0
    %223 = vmatpush1.msra.mxu0 0.0
    %224 = vmatprep.subr.mxu0 0.0
    %225 = vmatpush1.msra.mxu0 0.0
    %226 = vmatprep.mubr.f32.mxu0 0.0
    %227 = vmatmul.mubr.f32.gmra.mrb[0].mxu0 %v157
    %v228 = vpop.f32.mrb[0].mxu0
    %v229 = vadd.f32 %v153, %v228
    %v230 = vpop.f32.mrb[0].mxu0
    %231 = vmatprep.mubr.f32.mxu0 0.0
    %232 = vmatmul.mubr.f32.gmra.mrb[0].mxu0 %v160
    %v233 = vpop.f32.mrb[0].mxu0
    %v234 = vadd.f32 %v153, %v233
    %v235 = vpop.f32.mrb[0].mxu0
    %236 = vdwg.mxu0
    %v237 = vmul.f32 %v229, 0.35355338
    %v238 = vmul.f32 %v234, 0.35355338
    %v239 = vld [vmem:[#allocation10] sm:$0xff]
    %v240 = vld [vmem:[#allocation10 + $0x8] sm:$0xff]
    %v241 = vld [vmem:[#allocation10 + $0x10] sm:$0xff]
    %v242 = vld [vmem:[#allocation10 + $0x18] sm:$0xff]
    %v243 = vld [vmem:[%s6] sm:$0x1]
    %v245 = vlaneseq
    %v246 = vshrl.u32 %v245, 7
    %v247 = vsub.s32 0, %v246
    %v248 = vrot.slane %v243, %v247
    %v251 = vsel %vm155, %v140, 0
    %v254 = vsel %vm155, %v141, 0
    %v257 = vsel %vm155, %v142, 0
    %v260 = vsel %vm155, %v143, 0
    %262 = vmatprep.subr.mxu0 0.0
    %263 = vmatpush1.msra.mxu0 %v239
    %264 = vmatprep.subr.mxu0 0.0
    %265 = vmatpush1.msra.mxu0 %v240
    %266 = vmatprep.subr.mxu0 0.0
    %267 = vmatpush1.msra.mxu0 %v241
    %268 = vmatprep.subr.mxu0 0.0
    %269 = vmatpush1.msra.mxu0 %v242
    %270 = vmatprep.subr.mxu0 0.0
    %271 = vmatpush1.msra.mxu0 0.0
    %272 = vmatprep.subr.mxu0 0.0
    %273 = vmatpush1.msra.mxu0 0.0
    %274 = vmatprep.subr.mxu0 0.0
    %275 = vmatpush1.msra.mxu0 0.0
    %276 = vmatprep.subr.mxu0 0.0
    %277 = vmatpush1.msra.mxu0 0.0
    %278 = vmatprep.subr.mxu0 0.0
    %279 = vmatpush1.msra.mxu0 0.0
    %280 = vmatprep.subr.mxu0 0.0
    %281 = vmatpush1.msra.mxu0 0.0
    %282 = vmatprep.subr.mxu0 0.0
    %283 = vmatpush1.msra.mxu0 0.0
    %284 = vmatprep.subr.mxu0 0.0
    %285 = vmatpush1.msra.mxu0 0.0
    %286 = vmatprep.subr.mxu0 0.0
    %287 = vmatpush1.msra.mxu0 0.0
    %288 = vmatprep.subr.mxu0 0.0
    %289 = vmatpush1.msra.mxu0 0.0
    %290 = vmatprep.subr.mxu0 0.0
    %291 = vmatpush1.msra.mxu0 0.0
    %292 = vmatprep.subr.mxu0 0.0
    %293 = vmatpush1.msra.mxu0 0.0
    %294 = vmatprep.subr.mxu0 0.0
    %295 = vmatpush1.msra.mxu0 0.0
    %296 = vmatprep.subr.mxu0 0.0
    %297 = vmatpush1.msra.mxu0 0.0
    %298 = vmatprep.subr.mxu0 0.0
    %299 = vmatpush1.msra.mxu0 0.0
    %300 = vmatprep.subr.mxu0 0.0
    %301 = vmatpush1.msra.mxu0 0.0
    %302 = vmatprep.subr.mxu0 0.0
    %303 = vmatpush1.msra.mxu0 0.0
    %304 = vmatprep.subr.mxu0 0.0
    %305 = vmatpush1.msra.mxu0 0.0
    %306 = vmatprep.subr.mxu0 0.0
    %307 = vmatpush1.msra.mxu0 0.0
    %308 = vmatprep.subr.mxu0 0.0
    %309 = vmatpush1.msra.mxu0 0.0
    %310 = vmatprep.subr.mxu0 0.0
    %311 = vmatpush1.msra.mxu0 0.0
    %312 = vmatprep.subr.mxu0 0.0
    %313 = vmatpush1.msra.mxu0 0.0
    %314 = vmatprep.subr.mxu0 0.0
    %315 = vmatpush1.msra.mxu0 0.0
    %316 = vmatprep.subr.mxu0 0.0
    %317 = vmatpush1.msra.mxu0 0.0
    %318 = vmatprep.subr.mxu0 0.0
    %319 = vmatpush1.msra.mxu0 0.0
    %320 = vmatprep.subr.mxu0 0.0
    %321 = vmatpush1.msra.mxu0 0.0
    %322 = vmatprep.subr.mxu0 0.0
    %323 = vmatpush1.msra.mxu0 0.0
    %324 = vmatprep.subr.mxu0 0.0
    %325 = vmatpush1.msra.mxu0 0.0
    %326 = vmatprep.mubr.f32.mxu0 0.0
    %327 = vmatmul.mubr.f32.gmra.mrb[0].mxu0 %v251
    %v328 = vpop.f32.mrb[0].mxu0
    %v329 = vadd.f32 %v248, %v328
    %v330 = vpop.f32.mrb[0].mxu0
    %331 = vmatprep.mubr.f32.mxu0 0.0
    %332 = vmatmul.mubr.f32.gmra.mrb[0].mxu0 %v254
    %v333 = vpop.f32.mrb[0].mxu0
    %v334 = vadd.f32 %v248, %v333
    %v335 = vpop.f32.mrb[0].mxu0
    %336 = vmatprep.mubr.f32.mxu0 0.0
    %337 = vmatmul.mubr.f32.gmra.mrb[0].mxu0 %v257
    %v338 = vpop.f32.mrb[0].mxu0
    %v339 = vadd.f32 %v248, %v338
    %v340 = vpop.f32.mrb[0].mxu0
    %341 = vmatprep.mubr.f32.mxu0 0.0
    %342 = vmatmul.mubr.f32.gmra.mrb[0].mxu0 %v260
    %v343 = vpop.f32.mrb[0].mxu0
    %v344 = vadd.f32 %v248, %v343
    %v345 = vpop.f32.mrb[0].mxu0
    %346 = vdwg.mxu0
    %v347 = vld [vmem:[#allocation11] sm:$0xff]
    %v348 = vld [vmem:[#allocation11 + $0x8] sm:$0xff]
    %v349 = vld [vmem:[#allocation11 + $0x10] sm:$0xff]
    %v350 = vld [vmem:[#allocation11 + $0x18] sm:$0xff]
    %v351 = vld [vmem:[#allocation13] sm:$0x1]
    %v353 = vlaneseq
    %v354 = vshrl.u32 %v353, 7
    %v355 = vsub.s32 0, %v354
    %v356 = vrot.slane %v351, %v355
    %358 = vmatprep.subr.mxu0 0.0
    %359 = vmatpush1.msra.mxu0 %v347
    %360 = vmatprep.subr.mxu0 0.0
    %361 = vmatpush1.msra.mxu0 %v348
    %362 = vmatprep.subr.mxu0 0.0
    %363 = vmatpush1.msra.mxu0 %v349
    %364 = vmatprep.subr.mxu0 0.0
    %365 = vmatpush1.msra.mxu0 %v350
    %366 = vmatprep.subr.mxu0 0.0
    %367 = vmatpush1.msra.mxu0 0.0
    %368 = vmatprep.subr.mxu0 0.0
    %369 = vmatpush1.msra.mxu0 0.0
    %370 = vmatprep.subr.mxu0 0.0
    %371 = vmatpush1.msra.mxu0 0.0
    %372 = vmatprep.subr.mxu0 0.0
    %373 = vmatpush1.msra.mxu0 0.0
    %374 = vmatprep.subr.mxu0 0.0
    %375 = vmatpush1.msra.mxu0 0.0
    %376 = vmatprep.subr.mxu0 0.0
    %377 = vmatpush1.msra.mxu0 0.0
    %378 = vmatprep.subr.mxu0 0.0
    %379 = vmatpush1.msra.mxu0 0.0
    %380 = vmatprep.subr.mxu0 0.0
    %381 = vmatpush1.msra.mxu0 0.0
    %382 = vmatprep.subr.mxu0 0.0
    %383 = vmatpush1.msra.mxu0 0.0
    %384 = vmatprep.subr.mxu0 0.0
    %385 = vmatpush1.msra.mxu0 0.0
    %386 = vmatprep.subr.mxu0 0.0
    %387 = vmatpush1.msra.mxu0 0.0
    %388 = vmatprep.subr.mxu0 0.0
    %389 = vmatpush1.msra.mxu0 0.0
    %390 = vmatprep.subr.mxu0 0.0
    %391 = vmatpush1.msra.mxu0 0.0
    %392 = vmatprep.subr.mxu0 0.0
    %393 = vmatpush1.msra.mxu0 0.0
    %394 = vmatprep.subr.mxu0 0.0
    %395 = vmatpush1.msra.mxu0 0.0
    %396 = vmatprep.subr.mxu0 0.0
    %397 = vmatpush1.msra.mxu0 0.0
    %398 = vmatprep.subr.mxu0 0.0
    %399 = vmatpush1.msra.mxu0 0.0
    %400 = vmatprep.subr.mxu0 0.0
    %401 = vmatpush1.msra.mxu0 0.0
    %402 = vmatprep.subr.mxu0 0.0
    %403 = vmatpush1.msra.mxu0 0.0
    %404 = vmatprep.subr.mxu0 0.0
    %405 = vmatpush1.msra.mxu0 0.0
    %406 = vmatprep.subr.mxu0 0.0
    %407 = vmatpush1.msra.mxu0 0.0
    %408 = vmatprep.subr.mxu0 0.0
    %409 = vmatpush1.msra.mxu0 0.0
    %410 = vmatprep.subr.mxu0 0.0
    %411 = vmatpush1.msra.mxu0 0.0
    %412 = vmatprep.subr.mxu0 0.0
    %413 = vmatpush1.msra.mxu0 0.0
    %414 = vmatprep.subr.mxu0 0.0
    %415 = vmatpush1.msra.mxu0 0.0
    %416 = vmatprep.subr.mxu0 0.0
    %417 = vmatpush1.msra.mxu0 0.0
    %418 = vmatprep.subr.mxu0 0.0
    %419 = vmatpush1.msra.mxu0 0.0
    %420 = vmatprep.subr.mxu0 0.0
    %421 = vmatpush1.msra.mxu0 0.0
    %422 = vmatprep.mubr.f32.mxu0 0.0
    %423 = vmatmul.mubr.f32.gmra.mrb[0].mxu0 %v251
    %v424 = vpop.f32.mrb[0].mxu0
    %v425 = vadd.f32 %v356, %v424
    %v426 = vpop.f32.mrb[0].mxu0
    %427 = vmatprep.mubr.f32.mxu0 0.0
    %428 = vmatmul.mubr.f32.gmra.mrb[0].mxu0 %v254
    %v429 = vpop.f32.mrb[0].mxu0
    %v430 = vadd.f32 %v356, %v429
    %v431 = vpop.f32.mrb[0].mxu0
    %432 = vmatprep.mubr.f32.mxu0 0.0
    %433 = vmatmul.mubr.f32.gmra.mrb[0].mxu0 %v257
    %v434 = vpop.f32.mrb[0].mxu0
    %v435 = vadd.f32 %v356, %v434
    %v436 = vpop.f32.mrb[0].mxu0
    %437 = vmatprep.mubr.f32.mxu0 0.0
    %438 = vmatmul.mubr.f32.gmra.mrb[0].mxu0 %v260
    %v439 = vpop.f32.mrb[0].mxu0
    %v440 = vadd.f32 %v356, %v439
    %v441 = vpop.f32.mrb[0].mxu0
    %442 = vdwg.mxu0
    %v443 = vld [vmem:[#allocation7] sm:$0xff]
    %v444 = vld [vmem:[#allocation7 + $0x8] sm:$0xff]
    %vm445 = vcmp.gt.f32.partialorder %v443, 0.5
    %vm446 = vcmp.gt.f32.partialorder %v444, 0.5
    %vm447 = vcmask 64512
    %v449 = vsel %vm447, %v237, 0
    %v452 = vsel %vm447, %v329, 0
    %v455 = vsel %vm447, %v334, 0
    %457 = vmatprep.subr.mxu0 0.0
    %458 = vmatpush1.xpose.msra.mxu0 %v452
    %459 = vmatprep.subr.mxu0 0.0
    %460 = vmatpush1.xpose.msra.mxu0 %v455
    %461 = vmatprep.subr.mxu0 0.0
    %462 = vmatpush1.xpose.msra.mxu0 0.0
    %463 = vmatprep.subr.mxu0 0.0
    %464 = vmatpush1.xpose.msra.mxu0 0.0
    %465 = vmatprep.subr.mxu0 0.0
    %466 = vmatpush1.xpose.msra.mxu0 0.0
    %467 = vmatprep.subr.mxu0 0.0
    %468 = vmatpush1.xpose.msra.mxu0 0.0
    %469 = vmatprep.subr.mxu0 0.0
    %470 = vmatpush1.xpose.msra.mxu0 0.0
    %471 = vmatprep.subr.mxu0 0.0
    %472 = vmatpush1.xpose.msra.mxu0 0.0
    %473 = vmatprep.subr.mxu0 0.0
    %474 = vmatpush1.xpose.msra.mxu0 0.0
    %475 = vmatprep.subr.mxu0 0.0
    %476 = vmatpush1.xpose.msra.mxu0 0.0
    %477 = vmatprep.subr.mxu0 0.0
    %478 = vmatpush1.xpose.msra.mxu0 0.0
    %479 = vmatprep.subr.mxu0 0.0
    %480 = vmatpush1.xpose.msra.mxu0 0.0
    %481 = vmatprep.subr.mxu0 0.0
    %482 = vmatpush1.xpose.msra.mxu0 0.0
    %483 = vmatprep.subr.mxu0 0.0
    %484 = vmatpush1.xpose.msra.mxu0 0.0
    %485 = vmatprep.subr.mxu0 0.0
    %486 = vmatpush1.xpose.msra.mxu0 0.0
    %487 = vmatprep.subr.mxu0 0.0
    %488 = vmatpush1.xpose.msra.mxu0 0.0
    %489 = vmatprep.subr.mxu0 0.0
    %490 = vmatpush1.xpose.msra.mxu0 0.0
    %491 = vmatprep.subr.mxu0 0.0
    %492 = vmatpush1.xpose.msra.mxu0 0.0
    %493 = vmatprep.subr.mxu0 0.0
    %494 = vmatpush1.xpose.msra.mxu0 0.0
    %495 = vmatprep.subr.mxu0 0.0
    %496 = vmatpush1.xpose.msra.mxu0 0.0
    %497 = vmatprep.subr.mxu0 0.0
    %498 = vmatpush1.xpose.msra.mxu0 0.0
    %499 = vmatprep.subr.mxu0 0.0
    %500 = vmatpush1.xpose.msra.mxu0 0.0
    %501 = vmatprep.subr.mxu0 0.0
    %502 = vmatpush1.xpose.msra.mxu0 0.0
    %503 = vmatprep.subr.mxu0 0.0
    %504 = vmatpush1.xpose.msra.mxu0 0.0
    %505 = vmatprep.subr.mxu0 0.0
    %506 = vmatpush1.xpose.msra.mxu0 0.0
    %507 = vmatprep.subr.mxu0 0.0
    %508 = vmatpush1.xpose.msra.mxu0 0.0
    %509 = vmatprep.subr.mxu0 0.0
    %510 = vmatpush1.xpose.msra.mxu0 0.0
    %511 = vmatprep.subr.mxu0 0.0
    %512 = vmatpush1.xpose.msra.mxu0 0.0
    %513 = vmatprep.subr.mxu0 0.0
    %514 = vmatpush1.xpose.msra.mxu0 0.0
    %515 = vmatprep.subr.mxu0 0.0
    %516 = vmatpush1.xpose.msra.mxu0 0.0
    %517 = vmatprep.subr.mxu0 0.0
    %518 = vmatpush1.xpose.msra.mxu0 0.0
    %519 = vmatprep.subr.mxu0 0.0
    %520 = vmatpush1.xpose.msra.mxu0 0.0
    %521 = vmatprep.mubr.f32.mxu0 0.0
    %522 = vmatmul.mubr.f32.gmra.mrb[0].mxu0 %v449
    %v523 = vpop.f32.mrb[0].mxu0
    %v524 = vadd.f32 0.0, %v523
    %v525 = vpop.f32.mrb[0].mxu0
    %526 = vdwg.mxu0
    %v528 = vsel %vm447, %v238, 0
    %v531 = vsel %vm447, %v339, 0
    %v534 = vsel %vm447, %v344, 0
    %536 = vmatprep.subr.mxu0 0.0
    %537 = vmatpush1.xpose.msra.mxu0 %v531
    %538 = vmatprep.subr.mxu0 0.0
    %539 = vmatpush1.xpose.msra.mxu0 %v534
    %540 = vmatprep.subr.mxu0 0.0
    %541 = vmatpush1.xpose.msra.mxu0 0.0
    %542 = vmatprep.subr.mxu0 0.0
    %543 = vmatpush1.xpose.msra.mxu0 0.0
    %544 = vmatprep.subr.mxu0 0.0
    %545 = vmatpush1.xpose.msra.mxu0 0.0
    %546 = vmatprep.subr.mxu0 0.0
    %547 = vmatpush1.xpose.msra.mxu0 0.0
    %548 = vmatprep.subr.mxu0 0.0
    %549 = vmatpush1.xpose.msra.mxu0 0.0
    %550 = vmatprep.subr.mxu0 0.0
    %551 = vmatpush1.xpose.msra.mxu0 0.0
    %552 = vmatprep.subr.mxu0 0.0
    %553 = vmatpush1.xpose.msra.mxu0 0.0
    %554 = vmatprep.subr.mxu0 0.0
    %555 = vmatpush1.xpose.msra.mxu0 0.0
    %556 = vmatprep.subr.mxu0 0.0
    %557 = vmatpush1.xpose.msra.mxu0 0.0
    %558 = vmatprep.subr.mxu0 0.0
    %559 = vmatpush1.xpose.msra.mxu0 0.0
    %560 = vmatprep.subr.mxu0 0.0
    %561 = vmatpush1.xpose.msra.mxu0 0.0
    %562 = vmatprep.subr.mxu0 0.0
    %563 = vmatpush1.xpose.msra.mxu0 0.0
    %564 = vmatprep.subr.mxu0 0.0
    %565 = vmatpush1.xpose.msra.mxu0 0.0
    %566 = vmatprep.subr.mxu0 0.0
    %567 = vmatpush1.xpose.msra.mxu0 0.0
    %568 = vmatprep.subr.mxu0 0.0
    %569 = vmatpush1.xpose.msra.mxu0 0.0
    %570 = vmatprep.subr.mxu0 0.0
    %571 = vmatpush1.xpose.msra.mxu0 0.0
    %572 = vmatprep.subr.mxu0 0.0
    %573 = vmatpush1.xpose.msra.mxu0 0.0
    %574 = vmatprep.subr.mxu0 0.0
    %575 = vmatpush1.xpose.msra.mxu0 0.0
    %576 = vmatprep.subr.mxu0 0.0
    %577 = vmatpush1.xpose.msra.mxu0 0.0
    %578 = vmatprep.subr.mxu0 0.0
    %579 = vmatpush1.xpose.msra.mxu0 0.0
    %580 = vmatprep.subr.mxu0 0.0
    %581 = vmatpush1.xpose.msra.mxu0 0.0
    %582 = vmatprep.subr.mxu0 0.0
    %583 = vmatpush1.xpose.msra.mxu0 0.0
    %584 = vmatprep.subr.mxu0 0.0
    %585 = vmatpush1.xpose.msra.mxu0 0.0
    %586 = vmatprep.subr.mxu0 0.0
    %587 = vmatpush1.xpose.msra.mxu0 0.0
    %588 = vmatprep.subr.mxu0 0.0
    %589 = vmatpush1.xpose.msra.mxu0 0.0
    %590 = vmatprep.subr.mxu0 0.0
    %591 = vmatpush1.xpose.msra.mxu0 0.0
    %592 = vmatprep.subr.mxu0 0.0
    %593 = vmatpush1.xpose.msra.mxu0 0.0
    %594 = vmatprep.subr.mxu0 0.0
    %595 = vmatpush1.xpose.msra.mxu0 0.0
    %596 = vmatprep.subr.mxu0 0.0
    %597 = vmatpush1.xpose.msra.mxu0 0.0
    %598 = vmatprep.subr.mxu0 0.0
    %599 = vmatpush1.xpose.msra.mxu0 0.0
    %600 = vmatprep.mubr.f32.mxu0 0.0
    %601 = vmatmul.mubr.f32.gmra.mrb[0].mxu0 %v528
    %v602 = vpop.f32.mrb[0].mxu0
    %v603 = vadd.f32 0.0, %v602
    %v604 = vpop.f32.mrb[0].mxu0
    %605 = vdwg.mxu0
    %v606 = vsel %vm445, -1e+09, %v524
    %v607 = vsel %vm446, -1e+09, %v603
    %vm608 = vcmask 130048
    %v609 = vsel %vm608, %v606, -inf
    %610 = vmax.xlane.f32.xlu0 %v609
    %v611 = vpop.xlane.xlu0 %610
    %v612 = vsel %vm608, %v607, -inf
    %613 = vmax.xlane.f32.xlu0 %v612
    %v614 = vpop.xlane.xlu0 %613
    %v615 = vsub.f32 %v606, %v611
    %v616 = vsub.f32 %v607, %v614
    %v617 = vmul.f32 %v615, 1.442695
    %v618 = vpow.pop %v617
    %v619 = vmul.f32 %v616, 1.442695
    %v620 = vpow.pop %v619
    %v621 = vsel %vm608, %v618, 0.0
    %622 = vadd.xlane.f32.xlu0 %v621
    %v623 = vpop.xlane.xlu0 %622
    %v624 = vsel %vm608, %v620, 0.0
    %625 = vadd.xlane.f32.xlu0 %v624
    %v626 = vpop.xlane.xlu0 %625
    %v627 = vrcp.pop %v623
    %v628 = vrcp.pop %v626
    %v629 = vmul.f32 %v618, %v627
    %v630 = vmul.f32 %v620, %v628
    %v632 = vsel %vm608, %v629, 0
    %634 = vmatprep.subr.mxu0 0.0
    %635 = vmatpush1.msra.mxu0 %v425
    %636 = vmatprep.subr.mxu0 0.0
    %637 = vmatpush1.msra.mxu0 %v430
    %638 = vmatprep.subr.mxu0 0.0
    %639 = vmatpush1.msra.mxu0 0.0
    %640 = vmatprep.subr.mxu0 0.0
    %641 = vmatpush1.msra.mxu0 0.0
    %642 = vmatprep.subr.mxu0 0.0
    %643 = vmatpush1.msra.mxu0 0.0
    %644 = vmatprep.subr.mxu0 0.0
    %645 = vmatpush1.msra.mxu0 0.0
    %646 = vmatprep.subr.mxu0 0.0
    %647 = vmatpush1.msra.mxu0 0.0
    %648 = vmatprep.subr.mxu0 0.0
    %649 = vmatpush1.msra.mxu0 0.0
    %650 = vmatprep.subr.mxu0 0.0
    %651 = vmatpush1.msra.mxu0 0.0
    %652 = vmatprep.subr.mxu0 0.0
    %653 = vmatpush1.msra.mxu0 0.0
    %654 = vmatprep.subr.mxu0 0.0
    %655 = vmatpush1.msra.mxu0 0.0
    %656 = vmatprep.subr.mxu0 0.0
    %657 = vmatpush1.msra.mxu0 0.0
    %658 = vmatprep.subr.mxu0 0.0
    %659 = vmatpush1.msra.mxu0 0.0
    %660 = vmatprep.subr.mxu0 0.0
    %661 = vmatpush1.msra.mxu0 0.0
    %662 = vmatprep.subr.mxu0 0.0
    %663 = vmatpush1.msra.mxu0 0.0
    %664 = vmatprep.subr.mxu0 0.0
    %665 = vmatpush1.msra.mxu0 0.0
    %666 = vmatprep.subr.mxu0 0.0
    %667 = vmatpush1.msra.mxu0 0.0
    %668 = vmatprep.subr.mxu0 0.0
    %669 = vmatpush1.msra.mxu0 0.0
    %670 = vmatprep.subr.mxu0 0.0
    %671 = vmatpush1.msra.mxu0 0.0
    %672 = vmatprep.subr.mxu0 0.0
    %673 = vmatpush1.msra.mxu0 0.0
    %674 = vmatprep.subr.mxu0 0.0
    %675 = vmatpush1.msra.mxu0 0.0
    %676 = vmatprep.subr.mxu0 0.0
    %677 = vmatpush1.msra.mxu0 0.0
    %678 = vmatprep.subr.mxu0 0.0
    %679 = vmatpush1.msra.mxu0 0.0
    %680 = vmatprep.subr.mxu0 0.0
    %681 = vmatpush1.msra.mxu0 0.0
    %682 = vmatprep.subr.mxu0 0.0
    %683 = vmatpush1.msra.mxu0 0.0
    %684 = vmatprep.subr.mxu0 0.0
    %685 = vmatpush1.msra.mxu0 0.0
    %686 = vmatprep.subr.mxu0 0.0
    %687 = vmatpush1.msra.mxu0 0.0
    %688 = vmatprep.subr.mxu0 0.0
    %689 = vmatpush1.msra.mxu0 0.0
    %690 = vmatprep.subr.mxu0 0.0
    %691 = vmatpush1.msra.mxu0 0.0
    %692 = vmatprep.subr.mxu0 0.0
    %693 = vmatpush1.msra.mxu0 0.0
    %694 = vmatprep.subr.mxu0 0.0
    %695 = vmatpush1.msra.mxu0 0.0
    %696 = vmatprep.subr.mxu0 0.0
    %697 = vmatpush1.msra.mxu0 0.0
    %698 = vmatprep.mubr.f32.mxu0 0.0
    %699 = vmatmul.mubr.f32.gmra.mrb[0].mxu0 %v632
    %v700 = vpop.f32.mrb[0].mxu0
    %v701 = vadd.f32 0.0, %v700
    %v702 = vpop.f32.mrb[0].mxu0
    %703 = vdwg.mxu0
    %v705 = vsel %vm608, %v630, 0
    %707 = vmatprep.subr.mxu0 0.0
    %708 = vmatpush1.msra.mxu0 %v435
    %709 = vmatprep.subr.mxu0 0.0
    %710 = vmatpush1.msra.mxu0 %v440
    %711 = vmatprep.subr.mxu0 0.0
    %712 = vmatpush1.msra.mxu0 0.0
    %713 = vmatprep.subr.mxu0 0.0
    %714 = vmatpush1.msra.mxu0 0.0
    %715 = vmatprep.subr.mxu0 0.0
    %716 = vmatpush1.msra.mxu0 0.0
    %717 = vmatprep.subr.mxu0 0.0
    %718 = vmatpush1.msra.mxu0 0.0
    %719 = vmatprep.subr.mxu0 0.0
    %720 = vmatpush1.msra.mxu0 0.0
    %721 = vmatprep.subr.mxu0 0.0
    %722 = vmatpush1.msra.mxu0 0.0
    %723 = vmatprep.subr.mxu0 0.0
    %724 = vmatpush1.msra.mxu0 0.0
    %725 = vmatprep.subr.mxu0 0.0
    %726 = vmatpush1.msra.mxu0 0.0
    %727 = vmatprep.subr.mxu0 0.0
    %728 = vmatpush1.msra.mxu0 0.0
    %729 = vmatprep.subr.mxu0 0.0
    %730 = vmatpush1.msra.mxu0 0.0
    %731 = vmatprep.subr.mxu0 0.0
    %732 = vmatpush1.msra.mxu0 0.0
    %733 = vmatprep.subr.mxu0 0.0
    %734 = vmatpush1.msra.mxu0 0.0
    %735 = vmatprep.subr.mxu0 0.0
    %736 = vmatpush1.msra.mxu0 0.0
    %737 = vmatprep.subr.mxu0 0.0
    %738 = vmatpush1.msra.mxu0 0.0
    %739 = vmatprep.subr.mxu0 0.0
    %740 = vmatpush1.msra.mxu0 0.0
    %741 = vmatprep.subr.mxu0 0.0
    %742 = vmatpush1.msra.mxu0 0.0
    %743 = vmatprep.subr.mxu0 0.0
    %744 = vmatpush1.msra.mxu0 0.0
    %745 = vmatprep.subr.mxu0 0.0
    %746 = vmatpush1.msra.mxu0 0.0
    %747 = vmatprep.subr.mxu0 0.0
    %748 = vmatpush1.msra.mxu0 0.0
    %749 = vmatprep.subr.mxu0 0.0
    %750 = vmatpush1.msra.mxu0 0.0
    %751 = vmatprep.subr.mxu0 0.0
    %752 = vmatpush1.msra.mxu0 0.0
    %753 = vmatprep.subr.mxu0 0.0
    %754 = vmatpush1.msra.mxu0 0.0
    %755 = vmatprep.subr.mxu0 0.0
    %756 = vmatpush1.msra.mxu0 0.0
    %757 = vmatprep.subr.mxu0 0.0
    %758 = vmatpush1.msra.mxu0 0.0
    %759 = vmatprep.subr.mxu0 0.0
    %760 = vmatpush1.msra.mxu0 0.0
    %761 = vmatprep.subr.mxu0 0.0
    %762 = vmatpush1.msra.mxu0 0.0
    %763 = vmatprep.subr.mxu0 0.0
    %764 = vmatpush1.msra.mxu0 0.0
    %765 = vmatprep.subr.mxu0 0.0
    %766 = vmatpush1.msra.mxu0 0.0
    %767 = vmatprep.subr.mxu0 0.0
    %768 = vmatpush1.msra.mxu0 0.0
    %769 = vmatprep.subr.mxu0 0.0
    %770 = vmatpush1.msra.mxu0 0.0
    %771 = vmatprep.mubr.f32.mxu0 0.0
    %772 = vmatmul.mubr.f32.gmra.mrb[0].mxu0 %v705
    %v773 = vpop.f32.mrb[0].mxu0
    %v774 = vadd.f32 0.0, %v773
    %v775 = vpop.f32.mrb[0].mxu0
    %776 = vdwg.mxu0
    %777 = vrot.lane.b32.xlu0 %v237, 120
    %v778 = vpop.permute.xlu0 %777
    %779 = vrot.lane.b32.xlu0 %v329, 120
    %v780 = vpop.permute.xlu0 %779
    %781 = vrot.lane.b32.xlu0 %v334, 120
    %v782 = vpop.permute.xlu0 %781
    %v783 = vsel %vm447, %v778, 0
    %v785 = vsel %vm447, %v780, 0
    %v787 = vsel %vm447, %v782, 0
    %789 = vmatprep.subr.mxu0 0.0
    %790 = vmatpush1.xpose.msra.mxu0 %v785
    %791 = vmatprep.subr.mxu0 0.0
    %792 = vmatpush1.xpose.msra.mxu0 %v787
    %793 = vmatprep.subr.mxu0 0.0
    %794 = vmatpush1.xpose.msra.mxu0 0.0
    %795 = vmatprep.subr.mxu0 0.0
    %796 = vmatpush1.xpose.msra.mxu0 0.0
    %797 = vmatprep.subr.mxu0 0.0
    %798 = vmatpush1.xpose.msra.mxu0 0.0
    %799 = vmatprep.subr.mxu0 0.0
    %800 = vmatpush1.xpose.msra.mxu0 0.0
    %801 = vmatprep.subr.mxu0 0.0
    %802 = vmatpush1.xpose.msra.mxu0 0.0
    %803 = vmatprep.subr.mxu0 0.0
    %804 = vmatpush1.xpose.msra.mxu0 0.0
    %805 = vmatprep.subr.mxu0 0.0
    %806 = vmatpush1.xpose.msra.mxu0 0.0
    %807 = vmatprep.subr.mxu0 0.0
    %808 = vmatpush1.xpose.msra.mxu0 0.0
    %809 = vmatprep.subr.mxu0 0.0
    %810 = vmatpush1.xpose.msra.mxu0 0.0
    %811 = vmatprep.subr.mxu0 0.0
    %812 = vmatpush1.xpose.msra.mxu0 0.0
    %813 = vmatprep.subr.mxu0 0.0
    %814 = vmatpush1.xpose.msra.mxu0 0.0
    %815 = vmatprep.subr.mxu0 0.0
    %816 = vmatpush1.xpose.msra.mxu0 0.0
    %817 = vmatprep.subr.mxu0 0.0
    %818 = vmatpush1.xpose.msra.mxu0 0.0
    %819 = vmatprep.subr.mxu0 0.0
    %820 = vmatpush1.xpose.msra.mxu0 0.0
    %821 = vmatprep.subr.mxu0 0.0
    %822 = vmatpush1.xpose.msra.mxu0 0.0
    %823 = vmatprep.subr.mxu0 0.0
    %824 = vmatpush1.xpose.msra.mxu0 0.0
    %825 = vmatprep.subr.mxu0 0.0
    %826 = vmatpush1.xpose.msra.mxu0 0.0
    %827 = vmatprep.subr.mxu0 0.0
    %828 = vmatpush1.xpose.msra.mxu0 0.0
    %829 = vmatprep.subr.mxu0 0.0
    %830 = vmatpush1.xpose.msra.mxu0 0.0
    %831 = vmatprep.subr.mxu0 0.0
    %832 = vmatpush1.xpose.msra.mxu0 0.0
    %833 = vmatprep.subr.mxu0 0.0
    %834 = vmatpush1.xpose.msra.mxu0 0.0
    %835 = vmatprep.subr.mxu0 0.0
    %836 = vmatpush1.xpose.msra.mxu0 0.0
    %837 = vmatprep.subr.mxu0 0.0
    %838 = vmatpush1.xpose.msra.mxu0 0.0
    %839 = vmatprep.subr.mxu0 0.0
    %840 = vmatpush1.xpose.msra.mxu0 0.0
    %841 = vmatprep.subr.mxu0 0.0
    %842 = vmatpush1.xpose.msra.mxu0 0.0
    %843 = vmatprep.subr.mxu0 0.0
    %844 = vmatpush1.xpose.msra.mxu0 0.0
    %845 = vmatprep.subr.mxu0 0.0
    %846 = vmatpush1.xpose.msra.mxu0 0.0
    %847 = vmatprep.subr.mxu0 0.0
    %848 = vmatpush1.xpose.msra.mxu0 0.0
    %849 = vmatprep.subr.mxu0 0.0
    %850 = vmatpush1.xpose.msra.mxu0 0.0
    %851 = vmatprep.subr.mxu0 0.0
    %852 = vmatpush1.xpose.msra.mxu0 0.0
    %853 = vmatprep.mubr.f32.mxu0 0.0
    %854 = vmatmul.mubr.f32.gmra.mrb[0].mxu0 %v783
    %v855 = vpop.f32.mrb[0].mxu0
    %v856 = vadd.f32 0.0, %v855
    %v857 = vpop.f32.mrb[0].mxu0
    %858 = vdwg.mxu0
    %859 = vrot.lane.b32.xlu0 %v238, 120
    %v860 = vpop.permute.xlu0 %859
    %861 = vrot.lane.b32.xlu0 %v339, 120
    %v862 = vpop.permute.xlu0 %861
    %863 = vrot.lane.b32.xlu0 %v344, 120
    %v864 = vpop.permute.xlu0 %863
    %v865 = vsel %vm447, %v860, 0
    %v867 = vsel %vm447, %v862, 0
    %v869 = vsel %vm447, %v864, 0
    %871 = vmatprep.subr.mxu0 0.0
    %872 = vmatpush1.xpose.msra.mxu0 %v867
    %873 = vmatprep.subr.mxu0 0.0
    %874 = vmatpush1.xpose.msra.mxu0 %v869
    %875 = vmatprep.subr.mxu0 0.0
    %876 = vmatpush1.xpose.msra.mxu0 0.0
    %877 = vmatprep.subr.mxu0 0.0
    %878 = vmatpush1.xpose.msra.mxu0 0.0
    %879 = vmatprep.subr.mxu0 0.0
    %880 = vmatpush1.xpose.msra.mxu0 0.0
    %881 = vmatprep.subr.mxu0 0.0
    %882 = vmatpush1.xpose.msra.mxu0 0.0
    %883 = vmatprep.subr.mxu0 0.0
    %884 = vmatpush1.xpose.msra.mxu0 0.0
    %885 = vmatprep.subr.mxu0 0.0
    %886 = vmatpush1.xpose.msra.mxu0 0.0
    %887 = vmatprep.subr.mxu0 0.0
    %888 = vmatpush1.xpose.msra.mxu0 0.0
    %889 = vmatprep.subr.mxu0 0.0
    %890 = vmatpush1.xpose.msra.mxu0 0.0
    %891 = vmatprep.subr.mxu0 0.0
    %892 = vmatpush1.xpose.msra.mxu0 0.0
    %893 = vmatprep.subr.mxu0 0.0
    %894 = vmatpush1.xpose.msra.mxu0 0.0
    %895 = vmatprep.subr.mxu0 0.0
    %896 = vmatpush1.xpose.msra.mxu0 0.0
    %897 = vmatprep.subr.mxu0 0.0
    %898 = vmatpush1.xpose.msra.mxu0 0.0
    %899 = vmatprep.subr.mxu0 0.0
    %900 = vmatpush1.xpose.msra.mxu0 0.0
    %901 = vmatprep.subr.mxu0 0.0
    %902 = vmatpush1.xpose.msra.mxu0 0.0
    %903 = vmatprep.subr.mxu0 0.0
    %904 = vmatpush1.xpose.msra.mxu0 0.0
    %905 = vmatprep.subr.mxu0 0.0
    %906 = vmatpush1.xpose.msra.mxu0 0.0
    %907 = vmatprep.subr.mxu0 0.0
    %908 = vmatpush1.xpose.msra.mxu0 0.0
    %909 = vmatprep.subr.mxu0 0.0
    %910 = vmatpush1.xpose.msra.mxu0 0.0
    %911 = vmatprep.subr.mxu0 0.0
    %912 = vmatpush1.xpose.msra.mxu0 0.0
    %913 = vmatprep.subr.mxu0 0.0
    %914 = vmatpush1.xpose.msra.mxu0 0.0
    %915 = vmatprep.subr.mxu0 0.0
    %916 = vmatpush1.xpose.msra.mxu0 0.0
    %917 = vmatprep.subr.mxu0 0.0
    %918 = vmatpush1.xpose.msra.mxu0 0.0
    %919 = vmatprep.subr.mxu0 0.0
    %920 = vmatpush1.xpose.msra.mxu0 0.0
    %921 = vmatprep.subr.mxu0 0.0
    %922 = vmatpush1.xpose.msra.mxu0 0.0
    %923 = vmatprep.subr.mxu0 0.0
    %924 = vmatpush1.xpose.msra.mxu0 0.0
    %925 = vmatprep.subr.mxu0 0.0
    %926 = vmatpush1.xpose.msra.mxu0 0.0
    %927 = vmatprep.subr.mxu0 0.0
    %928 = vmatpush1.xpose.msra.mxu0 0.0
    %929 = vmatprep.subr.mxu0 0.0
    %930 = vmatpush1.xpose.msra.mxu0 0.0
    %931 = vmatprep.subr.mxu0 0.0
    %932 = vmatpush1.xpose.msra.mxu0 0.0
    %933 = vmatprep.subr.mxu0 0.0
    %934 = vmatpush1.xpose.msra.mxu0 0.0
    %935 = vmatprep.mubr.f32.mxu0 0.0
    %936 = vmatmul.mubr.f32.gmra.mrb[0].mxu0 %v865
    %v937 = vpop.f32.mrb[0].mxu0
    %v938 = vadd.f32 0.0, %v937
    %v939 = vpop.f32.mrb[0].mxu0
    %940 = vdwg.mxu0
    %v941 = vsel %vm445, -1e+09, %v856
    %v942 = vsel %vm446, -1e+09, %v938
    %v943 = vsel %vm608, %v941, -inf
    %944 = vmax.xlane.f32.xlu0 %v943
    %v945 = vpop.xlane.xlu0 %944
    %v946 = vsel %vm608, %v942, -inf
    %947 = vmax.xlane.f32.xlu0 %v946
    %v948 = vpop.xlane.xlu0 %947
    %v949 = vsub.f32 %v941, %v945
    %v950 = vsub.f32 %v942, %v948
    %v951 = vmul.f32 %v949, 1.442695
    %v952 = vpow.pop %v951
    %v953 = vmul.f32 %v950, 1.442695
    %v954 = vpow.pop %v953
    %v955 = vsel %vm608, %v952, 0.0
    %956 = vadd.xlane.f32.xlu0 %v955
    %v957 = vpop.xlane.xlu0 %956
    %v958 = vsel %vm608, %v954, 0.0
    %959 = vadd.xlane.f32.xlu0 %v958
    %v960 = vpop.xlane.xlu0 %959
    %v961 = vrcp.pop %v957
    %v962 = vrcp.pop %v960
    %v963 = vmul.f32 %v952, %v961
    %v964 = vmul.f32 %v954, %v962
    %967 = vrot.lane.b32.xlu0 %v425, 120
    %v968 = vpop.permute.xlu0 %967
    %969 = vrot.lane.b32.xlu0 %v430, 120
    %v970 = vpop.permute.xlu0 %969
    %v974 = vsel %vm608, %v963, 0
    %976 = vmatprep.subr.mxu0 0.0
    %977 = vmatpush1.msra.mxu0 %v968
    %978 = vmatprep.subr.mxu0 0.0
    %979 = vmatpush1.msra.mxu0 %v970
    %980 = vmatprep.subr.mxu0 0.0
    %981 = vmatpush1.msra.mxu0 0.0
    %982 = vmatprep.subr.mxu0 0.0
    %983 = vmatpush1.msra.mxu0 0.0
    %984 = vmatprep.subr.mxu0 0.0
    %985 = vmatpush1.msra.mxu0 0.0
    %986 = vmatprep.subr.mxu0 0.0
    %987 = vmatpush1.msra.mxu0 0.0
    %988 = vmatprep.subr.mxu0 0.0
    %989 = vmatpush1.msra.mxu0 0.0
    %990 = vmatprep.subr.mxu0 0.0
    %991 = vmatpush1.msra.mxu0 0.0
    %992 = vmatprep.subr.mxu0 0.0
    %993 = vmatpush1.msra.mxu0 0.0
    %994 = vmatprep.subr.mxu0 0.0
    %995 = vmatpush1.msra.mxu0 0.0
    %996 = vmatprep.subr.mxu0 0.0
    %997 = vmatpush1.msra.mxu0 0.0
    %998 = vmatprep.subr.mxu0 0.0
    %999 = vmatpush1.msra.mxu0 0.0
    %1000 = vmatprep.subr.mxu0 0.0
    %1001 = vmatpush1.msra.mxu0 0.0
    %1002 = vmatprep.subr.mxu0 0.0
    %1003 = vmatpush1.msra.mxu0 0.0
    %1004 = vmatprep.subr.mxu0 0.0
    %1005 = vmatpush1.msra.mxu0 0.0
    %1006 = vmatprep.subr.mxu0 0.0
    %1007 = vmatpush1.msra.mxu0 0.0
    %1008 = vmatprep.subr.mxu0 0.0
    %1009 = vmatpush1.msra.mxu0 0.0
    %1010 = vmatprep.subr.mxu0 0.0
    %1011 = vmatpush1.msra.mxu0 0.0
    %1012 = vmatprep.subr.mxu0 0.0
    %1013 = vmatpush1.msra.mxu0 0.0
    %1014 = vmatprep.subr.mxu0 0.0
    %1015 = vmatpush1.msra.mxu0 0.0
    %1016 = vmatprep.subr.mxu0 0.0
    %1017 = vmatpush1.msra.mxu0 0.0
    %1018 = vmatprep.subr.mxu0 0.0
    %1019 = vmatpush1.msra.mxu0 0.0
    %1020 = vmatprep.subr.mxu0 0.0
    %1021 = vmatpush1.msra.mxu0 0.0
    %1022 = vmatprep.subr.mxu0 0.0
    %1023 = vmatpush1.msra.mxu0 0.0
    %1024 = vmatprep.subr.mxu0 0.0
    %1025 = vmatpush1.msra.mxu0 0.0
    %1026 = vmatprep.subr.mxu0 0.0
    %1027 = vmatpush1.msra.mxu0 0.0
    %1028 = vmatprep.subr.mxu0 0.0
    %1029 = vmatpush1.msra.mxu0 0.0
    %1030 = vmatprep.subr.mxu0 0.0
    %1031 = vmatpush1.msra.mxu0 0.0
    %1032 = vmatprep.subr.mxu0 0.0
    %1033 = vmatpush1.msra.mxu0 0.0
    %1034 = vmatprep.subr.mxu0 0.0
    %1035 = vmatpush1.msra.mxu0 0.0
    %1036 = vmatprep.subr.mxu0 0.0
    %1037 = vmatpush1.msra.mxu0 0.0
    %1038 = vmatprep.subr.mxu0 0.0
    %1039 = vmatpush1.msra.mxu0 0.0
    %1040 = vmatprep.mubr.f32.mxu0 0.0
    %1041 = vmatmul.mubr.f32.gmra.mrb[0].mxu0 %v974
    %v1042 = vpop.f32.mrb[0].mxu0
    %v1043 = vadd.f32 0.0, %v1042
    %v1044 = vpop.f32.mrb[0].mxu0
    %1045 = vdwg.mxu0
    %1048 = vrot.lane.b32.xlu0 %v435, 120
    %v1049 = vpop.permute.xlu0 %1048
    %1050 = vrot.lane.b32.xlu0 %v440, 120
    %v1051 = vpop.permute.xlu0 %1050
    %v1055 = vsel %vm608, %v964, 0
    %1057 = vmatprep.subr.mxu0 0.0
    %1058 = vmatpush1.msra.mxu0 %v1049
    %1059 = vmatprep.subr.mxu0 0.0
    %1060 = vmatpush1.msra.mxu0 %v1051
    %1061 = vmatprep.subr.mxu0 0.0
    %1062 = vmatpush1.msra.mxu0 0.0
    %1063 = vmatprep.subr.mxu0 0.0
    %1064 = vmatpush1.msra.mxu0 0.0
    %1065 = vmatprep.subr.mxu0 0.0
    %1066 = vmatpush1.msra.mxu0 0.0
    %1067 = vmatprep.subr.mxu0 0.0
    %1068 = vmatpush1.msra.mxu0 0.0
    %1069 = vmatprep.subr.mxu0 0.0
    %1070 = vmatpush1.msra.mxu0 0.0
    %1071 = vmatprep.subr.mxu0 0.0
    %1072 = vmatpush1.msra.mxu0 0.0
    %1073 = vmatprep.subr.mxu0 0.0
    %1074 = vmatpush1.msra.mxu0 0.0
    %1075 = vmatprep.subr.mxu0 0.0
    %1076 = vmatpush1.msra.mxu0 0.0
    %1077 = vmatprep.subr.mxu0 0.0
    %1078 = vmatpush1.msra.mxu0 0.0
    %1079 = vmatprep.subr.mxu0 0.0
    %1080 = vmatpush1.msra.mxu0 0.0
    %1081 = vmatprep.subr.mxu0 0.0
    %1082 = vmatpush1.msra.mxu0 0.0
    %1083 = vmatprep.subr.mxu0 0.0
    %1084 = vmatpush1.msra.mxu0 0.0
    %1085 = vmatprep.subr.mxu0 0.0
    %1086 = vmatpush1.msra.mxu0 0.0
    %1087 = vmatprep.subr.mxu0 0.0
    %1088 = vmatpush1.msra.mxu0 0.0
    %1089 = vmatprep.subr.mxu0 0.0
    %1090 = vmatpush1.msra.mxu0 0.0
    %1091 = vmatprep.subr.mxu0 0.0
    %1092 = vmatpush1.msra.mxu0 0.0
    %1093 = vmatprep.subr.mxu0 0.0
    %1094 = vmatpush1.msra.mxu0 0.0
    %1095 = vmatprep.subr.mxu0 0.0
    %1096 = vmatpush1.msra.mxu0 0.0
    %1097 = vmatprep.subr.mxu0 0.0
    %1098 = vmatpush1.msra.mxu0 0.0
    %1099 = vmatprep.subr.mxu0 0.0
    %1100 = vmatpush1.msra.mxu0 0.0
    %1101 = vmatprep.subr.mxu0 0.0
    %1102 = vmatpush1.msra.mxu0 0.0
    %1103 = vmatprep.subr.mxu0 0.0
    %1104 = vmatpush1.msra.mxu0 0.0
    %1105 = vmatprep.subr.mxu0 0.0
    %1106 = vmatpush1.msra.mxu0 0.0
    %1107 = vmatprep.subr.mxu0 0.0
    %1108 = vmatpush1.msra.mxu0 0.0
    %1109 = vmatprep.subr.mxu0 0.0
    %1110 = vmatpush1.msra.mxu0 0.0
    %1111 = vmatprep.subr.mxu0 0.0
    %1112 = vmatpush1.msra.mxu0 0.0
    %1113 = vmatprep.subr.mxu0 0.0
    %1114 = vmatpush1.msra.mxu0 0.0
    %1115 = vmatprep.subr.mxu0 0.0
    %1116 = vmatpush1.msra.mxu0 0.0
    %1117 = vmatprep.subr.mxu0 0.0
    %1118 = vmatpush1.msra.mxu0 0.0
    %1119 = vmatprep.subr.mxu0 0.0
    %1120 = vmatpush1.msra.mxu0 0.0
    %1121 = vmatprep.mubr.f32.mxu0 0.0
    %1122 = vmatmul.mubr.f32.gmra.mrb[0].mxu0 %v1055
    %v1123 = vpop.f32.mrb[0].mxu0
    %v1124 = vadd.f32 0.0, %v1123
    %v1125 = vpop.f32.mrb[0].mxu0
    %1126 = vdwg.mxu0
    %1127 = vrot.lane.b32.xlu0 %v237, 112
    %v1128 = vpop.permute.xlu0 %1127
    %1129 = vrot.lane.b32.xlu0 %v329, 112
    %v1130 = vpop.permute.xlu0 %1129
    %1131 = vrot.lane.b32.xlu0 %v334, 112
    %v1132 = vpop.permute.xlu0 %1131
    %v1133 = vsel %vm447, %v1128, 0
    %v1135 = vsel %vm447, %v1130, 0
    %v1137 = vsel %vm447, %v1132, 0
    %1139 = vmatprep.subr.mxu0 0.0
    %1140 = vmatpush1.xpose.msra.mxu0 %v1135
    %1141 = vmatprep.subr.mxu0 0.0
    %1142 = vmatpush1.xpose.msra.mxu0 %v1137
    %1143 = vmatprep.subr.mxu0 0.0
    %1144 = vmatpush1.xpose.msra.mxu0 0.0
    %1145 = vmatprep.subr.mxu0 0.0
    %1146 = vmatpush1.xpose.msra.mxu0 0.0
    %1147 = vmatprep.subr.mxu0 0.0
    %1148 = vmatpush1.xpose.msra.mxu0 0.0
    %1149 = vmatprep.subr.mxu0 0.0
    %1150 = vmatpush1.xpose.msra.mxu0 0.0
    %1151 = vmatprep.subr.mxu0 0.0
    %1152 = vmatpush1.xpose.msra.mxu0 0.0
    %1153 = vmatprep.subr.mxu0 0.0
    %1154 = vmatpush1.xpose.msra.mxu0 0.0
    %1155 = vmatprep.subr.mxu0 0.0
    %1156 = vmatpush1.xpose.msra.mxu0 0.0
    %1157 = vmatprep.subr.mxu0 0.0
    %1158 = vmatpush1.xpose.msra.mxu0 0.0
    %1159 = vmatprep.subr.mxu0 0.0
    %1160 = vmatpush1.xpose.msra.mxu0 0.0
    %1161 = vmatprep.subr.mxu0 0.0
    %1162 = vmatpush1.xpose.msra.mxu0 0.0
    %1163 = vmatprep.subr.mxu0 0.0
    %1164 = vmatpush1.xpose.msra.mxu0 0.0
    %1165 = vmatprep.subr.mxu0 0.0
    %1166 = vmatpush1.xpose.msra.mxu0 0.0
    %1167 = vmatprep.subr.mxu0 0.0
    %1168 = vmatpush1.xpose.msra.mxu0 0.0
    %1169 = vmatprep.subr.mxu0 0.0
    %1170 = vmatpush1.xpose.msra.mxu0 0.0
    %1171 = vmatprep.subr.mxu0 0.0
    %1172 = vmatpush1.xpose.msra.mxu0 0.0
    %1173 = vmatprep.subr.mxu0 0.0
    %1174 = vmatpush1.xpose.msra.mxu0 0.0
    %1175 = vmatprep.subr.mxu0 0.0
    %1176 = vmatpush1.xpose.msra.mxu0 0.0
    %1177 = vmatprep.subr.mxu0 0.0
    %1178 = vmatpush1.xpose.msra.mxu0 0.0
    %1179 = vmatprep.subr.mxu0 0.0
    %1180 = vmatpush1.xpose.msra.mxu0 0.0
    %1181 = vmatprep.subr.mxu0 0.0
    %1182 = vmatpush1.xpose.msra.mxu0 0.0
    %1183 = vmatprep.subr.mxu0 0.0
    %1184 = vmatpush1.xpose.msra.mxu0 0.0
    %1185 = vmatprep.subr.mxu0 0.0
    %1186 = vmatpush1.xpose.msra.mxu0 0.0
    %1187 = vmatprep.subr.mxu0 0.0
    %1188 = vmatpush1.xpose.msra.mxu0 0.0
    %1189 = vmatprep.subr.mxu0 0.0
    %1190 = vmatpush1.xpose.msra.mxu0 0.0
    %1191 = vmatprep.subr.mxu0 0.0
    %1192 = vmatpush1.xpose.msra.mxu0 0.0
    %1193 = vmatprep.subr.mxu0 0.0
    %1194 = vmatpush1.xpose.msra.mxu0 0.0
    %1195 = vmatprep.subr.mxu0 0.0
    %1196 = vmatpush1.xpose.msra.mxu0 0.0
    %1197 = vmatprep.subr.mxu0 0.0
    %1198 = vmatpush1.xpose.msra.mxu0 0.0
    %1199 = vmatprep.subr.mxu0 0.0
    %1200 = vmatpush1.xpose.msra.mxu0 0.0
    %1201 = vmatprep.subr.mxu0 0.0
    %1202 = vmatpush1.xpose.msra.mxu0 0.0
    %1203 = vmatprep.mubr.f32.mxu0 0.0
    %1204 = vmatmul.mubr.f32.gmra.mrb[0].mxu0 %v1133
    %v1205 = vpop.f32.mrb[0].mxu0
    %v1206 = vadd.f32 0.0, %v1205
    %v1207 = vpop.f32.mrb[0].mxu0
    %1208 = vdwg.mxu0
    %1209 = vrot.lane.b32.xlu0 %v238, 112
    %v1210 = vpop.permute.xlu0 %1209
    %1211 = vrot.lane.b32.xlu0 %v339, 112
    %v1212 = vpop.permute.xlu0 %1211
    %1213 = vrot.lane.b32.xlu0 %v344, 112
    %v1214 = vpop.permute.xlu0 %1213
    %v1215 = vsel %vm447, %v1210, 0
    %v1217 = vsel %vm447, %v1212, 0
    %v1219 = vsel %vm447, %v1214, 0
    %1221 = vmatprep.subr.mxu0 0.0
    %1222 = vmatpush1.xpose.msra.mxu0 %v1217
    %1223 = vmatprep.subr.mxu0 0.0
    %1224 = vmatpush1.xpose.msra.mxu0 %v1219
    %1225 = vmatprep.subr.mxu0 0.0
    %1226 = vmatpush1.xpose.msra.mxu0 0.0
    %1227 = vmatprep.subr.mxu0 0.0
    %1228 = vmatpush1.xpose.msra.mxu0 0.0
    %1229 = vmatprep.subr.mxu0 0.0
    %1230 = vmatpush1.xpose.msra.mxu0 0.0
    %1231 = vmatprep.subr.mxu0 0.0
    %1232 = vmatpush1.xpose.msra.mxu0 0.0
    %1233 = vmatprep.subr.mxu0 0.0
    %1234 = vmatpush1.xpose.msra.mxu0 0.0
    %1235 = vmatprep.subr.mxu0 0.0
    %1236 = vmatpush1.xpose.msra.mxu0 0.0
    %1237 = vmatprep.subr.mxu0 0.0
    %1238 = vmatpush1.xpose.msra.mxu0 0.0
    %1239 = vmatprep.subr.mxu0 0.0
    %1240 = vmatpush1.xpose.msra.mxu0 0.0
    %1241 = vmatprep.subr.mxu0 0.0
    %1242 = vmatpush1.xpose.msra.mxu0 0.0
    %1243 = vmatprep.subr.mxu0 0.0
    %1244 = vmatpush1.xpose.msra.mxu0 0.0
    %1245 = vmatprep.subr.mxu0 0.0
    %1246 = vmatpush1.xpose.msra.mxu0 0.0
    %1247 = vmatprep.subr.mxu0 0.0
    %1248 = vmatpush1.xpose.msra.mxu0 0.0
    %1249 = vmatprep.subr.mxu0 0.0
    %1250 = vmatpush1.xpose.msra.mxu0 0.0
    %1251 = vmatprep.subr.mxu0 0.0
    %1252 = vmatpush1.xpose.msra.mxu0 0.0
    %1253 = vmatprep.subr.mxu0 0.0
    %1254 = vmatpush1.xpose.msra.mxu0 0.0
    %1255 = vmatprep.subr.mxu0 0.0
    %1256 = vmatpush1.xpose.msra.mxu0 0.0
    %1257 = vmatprep.subr.mxu0 0.0
    %1258 = vmatpush1.xpose.msra.mxu0 0.0
    %1259 = vmatprep.subr.mxu0 0.0
    %1260 = vmatpush1.xpose.msra.mxu0 0.0
    %1261 = vmatprep.subr.mxu0 0.0
    %1262 = vmatpush1.xpose.msra.mxu0 0.0
    %1263 = vmatprep.subr.mxu0 0.0
    %1264 = vmatpush1.xpose.msra.mxu0 0.0
    %1265 = vmatprep.subr.mxu0 0.0
    %1266 = vmatpush1.xpose.msra.mxu0 0.0
    %1267 = vmatprep.subr.mxu0 0.0
    %1268 = vmatpush1.xpose.msra.mxu0 0.0
    %1269 = vmatprep.subr.mxu0 0.0
    %1270 = vmatpush1.xpose.msra.mxu0 0.0
    %1271 = vmatprep.subr.mxu0 0.0
    %1272 = vmatpush1.xpose.msra.mxu0 0.0
    %1273 = vmatprep.subr.mxu0 0.0
    %1274 = vmatpush1.xpose.msra.mxu0 0.0
    %1275 = vmatprep.subr.mxu0 0.0
    %1276 = vmatpush1.xpose.msra.mxu0 0.0
    %1277 = vmatprep.subr.mxu0 0.0
    %1278 = vmatpush1.xpose.msra.mxu0 0.0
    %1279 = vmatprep.subr.mxu0 0.0
    %1280 = vmatpush1.xpose.msra.mxu0 0.0
    %1281 = vmatprep.subr.mxu0 0.0
    %1282 = vmatpush1.xpose.msra.mxu0 0.0
    %1283 = vmatprep.subr.mxu0 0.0
    %1284 = vmatpush1.xpose.msra.mxu0 0.0
    %1285 = vmatprep.mubr.f32.mxu0 0.0
    %1286 = vmatmul.mubr.f32.gmra.mrb[0].mxu0 %v1215
    %v1287 = vpop.f32.mrb[0].mxu0
    %v1288 = vadd.f32 0.0, %v1287
    %v1289 = vpop.f32.mrb[0].mxu0
    %1290 = vdwg.mxu0
    %v1291 = vsel %vm445, -1e+09, %v1206
    %v1292 = vsel %vm446, -1e+09, %v1288
    %v1293 = vsel %vm608, %v1291, -inf
    %1294 = vmax.xlane.f32.xlu0 %v1293
    %v1295 = vpop.xlane.xlu0 %1294
    %v1296 = vsel %vm608, %v1292, -inf
    %1297 = vmax.xlane.f32.xlu0 %v1296
    %v1298 = vpop.xlane.xlu0 %1297
    %v1299 = vsub.f32 %v1291, %v1295
    %v1300 = vsub.f32 %v1292, %v1298
    %v1301 = vmul.f32 %v1299, 1.442695
    %v1302 = vpow.pop %v1301
    %v1303 = vmul.f32 %v1300, 1.442695
    %v1304 = vpow.pop %v1303
    %v1305 = vsel %vm608, %v1302, 0.0
    %1306 = vadd.xlane.f32.xlu0 %v1305
    %v1307 = vpop.xlane.xlu0 %1306
    %v1308 = vsel %vm608, %v1304, 0.0
    %1309 = vadd.xlane.f32.xlu0 %v1308
    %v1310 = vpop.xlane.xlu0 %1309
    %v1311 = vrcp.pop %v1307
    %v1312 = vrcp.pop %v1310
    %v1313 = vmul.f32 %v1302, %v1311
    %v1314 = vmul.f32 %v1304, %v1312
    %1315 = vrot.lane.b32.xlu0 %v425, 112
    %v1316 = vpop.permute.xlu0 %1315
    %1317 = vrot.lane.b32.xlu0 %v430, 112
    %v1318 = vpop.permute.xlu0 %1317
    %v1322 = vsel %vm608, %v1313, 0
    %1324 = vmatprep.subr.mxu0 0.0
    %1325 = vmatpush1.msra.mxu0 %v1316
    %1326 = vmatprep.subr.mxu0 0.0
    %1327 = vmatpush1.msra.mxu0 %v1318
    %1328 = vmatprep.subr.mxu0 0.0
    %1329 = vmatpush1.msra.mxu0 0.0
    %1330 = vmatprep.subr.mxu0 0.0
    %1331 = vmatpush1.msra.mxu0 0.0
    %1332 = vmatprep.subr.mxu0 0.0
    %1333 = vmatpush1.msra.mxu0 0.0
    %1334 = vmatprep.subr.mxu0 0.0
    %1335 = vmatpush1.msra.mxu0 0.0
    %1336 = vmatprep.subr.mxu0 0.0
    %1337 = vmatpush1.msra.mxu0 0.0
    %1338 = vmatprep.subr.mxu0 0.0
    %1339 = vmatpush1.msra.mxu0 0.0
    %1340 = vmatprep.subr.mxu0 0.0
    %1341 = vmatpush1.msra.mxu0 0.0
    %1342 = vmatprep.subr.mxu0 0.0
    %1343 = vmatpush1.msra.mxu0 0.0
    %1344 = vmatprep.subr.mxu0 0.0
    %1345 = vmatpush1.msra.mxu0 0.0
    %1346 = vmatprep.subr.mxu0 0.0
    %1347 = vmatpush1.msra.mxu0 0.0
    %1348 = vmatprep.subr.mxu0 0.0
    %1349 = vmatpush1.msra.mxu0 0.0
    %1350 = vmatprep.subr.mxu0 0.0
    %1351 = vmatpush1.msra.mxu0 0.0
    %1352 = vmatprep.subr.mxu0 0.0
    %1353 = vmatpush1.msra.mxu0 0.0
    %1354 = vmatprep.subr.mxu0 0.0
    %1355 = vmatpush1.msra.mxu0 0.0
    %1356 = vmatprep.subr.mxu0 0.0
    %1357 = vmatpush1.msra.mxu0 0.0
    %1358 = vmatprep.subr.mxu0 0.0
    %1359 = vmatpush1.msra.mxu0 0.0
    %1360 = vmatprep.subr.mxu0 0.0
    %1361 = vmatpush1.msra.mxu0 0.0
    %1362 = vmatprep.subr.mxu0 0.0
    %1363 = vmatpush1.msra.mxu0 0.0
    %1364 = vmatprep.subr.mxu0 0.0
    %1365 = vmatpush1.msra.mxu0 0.0
    %1366 = vmatprep.subr.mxu0 0.0
    %1367 = vmatpush1.msra.mxu0 0.0
    %1368 = vmatprep.subr.mxu0 0.0
    %1369 = vmatpush1.msra.mxu0 0.0
    %1370 = vmatprep.subr.mxu0 0.0
    %1371 = vmatpush1.msra.mxu0 0.0
    %1372 = vmatprep.subr.mxu0 0.0
    %1373 = vmatpush1.msra.mxu0 0.0
    %1374 = vmatprep.subr.mxu0 0.0
    %1375 = vmatpush1.msra.mxu0 0.0
    %1376 = vmatprep.subr.mxu0 0.0
    %1377 = vmatpush1.msra.mxu0 0.0
    %1378 = vmatprep.subr.mxu0 0.0
    %1379 = vmatpush1.msra.mxu0 0.0
    %1380 = vmatprep.subr.mxu0 0.0
    %1381 = vmatpush1.msra.mxu0 0.0
    %1382 = vmatprep.subr.mxu0 0.0
    %1383 = vmatpush1.msra.mxu0 0.0
    %1384 = vmatprep.subr.mxu0 0.0
    %1385 = vmatpush1.msra.mxu0 0.0
    %1386 = vmatprep.subr.mxu0 0.0
    %1387 = vmatpush1.msra.mxu0 0.0
    %1388 = vmatprep.mubr.f32.mxu0 0.0
    %1389 = vmatmul.mubr.f32.gmra.mrb[0].mxu0 %v1322
    %v1390 = vpop.f32.mrb[0].mxu0
    %v1391 = vadd.f32 0.0, %v1390
    %v1392 = vpop.f32.mrb[0].mxu0
    %1393 = vdwg.mxu0
    %1394 = vrot.lane.b32.xlu0 %v435, 112
    %v1395 = vpop.permute.xlu0 %1394
    %1396 = vrot.lane.b32.xlu0 %v440, 112
    %v1397 = vpop.permute.xlu0 %1396
    %v1401 = vsel %vm608, %v1314, 0
    %1403 = vmatprep.subr.mxu0 0.0
    %1404 = vmatpush1.msra.mxu0 %v1395
    %1405 = vmatprep.subr.mxu0 0.0
    %1406 = vmatpush1.msra.mxu0 %v1397
    %1407 = vmatprep.subr.mxu0 0.0
    %1408 = vmatpush1.msra.mxu0 0.0
    %1409 = vmatprep.subr.mxu0 0.0
    %1410 = vmatpush1.msra.mxu0 0.0
    %1411 = vmatprep.subr.mxu0 0.0
    %1412 = vmatpush1.msra.mxu0 0.0
    %1413 = vmatprep.subr.mxu0 0.0
    %1414 = vmatpush1.msra.mxu0 0.0
    %1415 = vmatprep.subr.mxu0 0.0
    %1416 = vmatpush1.msra.mxu0 0.0
    %1417 = vmatprep.subr.mxu0 0.0
    %1418 = vmatpush1.msra.mxu0 0.0
    %1419 = vmatprep.subr.mxu0 0.0
    %1420 = vmatpush1.msra.mxu0 0.0
    %1421 = vmatprep.subr.mxu0 0.0
    %1422 = vmatpush1.msra.mxu0 0.0
    %1423 = vmatprep.subr.mxu0 0.0
    %1424 = vmatpush1.msra.mxu0 0.0
    %1425 = vmatprep.subr.mxu0 0.0
    %1426 = vmatpush1.msra.mxu0 0.0
    %1427 = vmatprep.subr.mxu0 0.0
    %1428 = vmatpush1.msra.mxu0 0.0
    %1429 = vmatprep.subr.mxu0 0.0
    %1430 = vmatpush1.msra.mxu0 0.0
    %1431 = vmatprep.subr.mxu0 0.0
    %1432 = vmatpush1.msra.mxu0 0.0
    %1433 = vmatprep.subr.mxu0 0.0
    %1434 = vmatpush1.msra.mxu0 0.0
    %1435 = vmatprep.subr.mxu0 0.0
    %1436 = vmatpush1.msra.mxu0 0.0
    %1437 = vmatprep.subr.mxu0 0.0
    %1438 = vmatpush1.msra.mxu0 0.0
    %1439 = vmatprep.subr.mxu0 0.0
    %1440 = vmatpush1.msra.mxu0 0.0
    %1441 = vmatprep.subr.mxu0 0.0
    %1442 = vmatpush1.msra.mxu0 0.0
    %1443 = vmatprep.subr.mxu0 0.0
    %1444 = vmatpush1.msra.mxu0 0.0
    %1445 = vmatprep.subr.mxu0 0.0
    %1446 = vmatpush1.msra.mxu0 0.0
    %1447 = vmatprep.subr.mxu0 0.0
    %1448 = vmatpush1.msra.mxu0 0.0
    %1449 = vmatprep.subr.mxu0 0.0
    %1450 = vmatpush1.msra.mxu0 0.0
    %1451 = vmatprep.subr.mxu0 0.0
    %1452 = vmatpush1.msra.mxu0 0.0
    %1453 = vmatprep.subr.mxu0 0.0
    %1454 = vmatpush1.msra.mxu0 0.0
    %1455 = vmatprep.subr.mxu0 0.0
    %1456 = vmatpush1.msra.mxu0 0.0
    %1457 = vmatprep.subr.mxu0 0.0
    %1458 = vmatpush1.msra.mxu0 0.0
    %1459 = vmatprep.subr.mxu0 0.0
    %1460 = vmatpush1.msra.mxu0 0.0
    %1461 = vmatprep.subr.mxu0 0.0
    %1462 = vmatpush1.msra.mxu0 0.0
    %1463 = vmatprep.subr.mxu0 0.0
    %1464 = vmatpush1.msra.mxu0 0.0
    %1465 = vmatprep.subr.mxu0 0.0
    %1466 = vmatpush1.msra.mxu0 0.0
    %1467 = vmatprep.mubr.f32.mxu0 0.0
    %1468 = vmatmul.mubr.f32.gmra.mrb[0].mxu0 %v1401
    %v1469 = vpop.f32.mrb[0].mxu0
    %v1470 = vadd.f32 0.0, %v1469
    %v1471 = vpop.f32.mrb[0].mxu0
    %1472 = vdwg.mxu0
    %1473 = vrot.lane.b32.xlu0 %v237, 104
    %v1474 = vpop.permute.xlu0 %1473
    %1475 = vrot.lane.b32.xlu0 %v329, 104
    %v1476 = vpop.permute.xlu0 %1475
    %1477 = vrot.lane.b32.xlu0 %v334, 104
    %v1478 = vpop.permute.xlu0 %1477
    %v1479 = vsel %vm447, %v1474, 0
    %v1481 = vsel %vm447, %v1476, 0
    %v1483 = vsel %vm447, %v1478, 0
    %1485 = vmatprep.subr.mxu0 0.0
    %1486 = vmatpush1.xpose.msra.mxu0 %v1481
    %1487 = vmatprep.subr.mxu0 0.0
    %1488 = vmatpush1.xpose.msra.mxu0 %v1483
    %1489 = vmatprep.subr.mxu0 0.0
    %1490 = vmatpush1.xpose.msra.mxu0 0.0
    %1491 = vmatprep.subr.mxu0 0.0
    %1492 = vmatpush1.xpose.msra.mxu0 0.0
    %1493 = vmatprep.subr.mxu0 0.0
    %1494 = vmatpush1.xpose.msra.mxu0 0.0
    %1495 = vmatprep.subr.mxu0 0.0
    %1496 = vmatpush1.xpose.msra.mxu0 0.0
    %1497 = vmatprep.subr.mxu0 0.0
    %1498 = vmatpush1.xpose.msra.mxu0 0.0
    %1499 = vmatprep.subr.mxu0 0.0
    %1500 = vmatpush1.xpose.msra.mxu0 0.0
    %1501 = vmatprep.subr.mxu0 0.0
    %1502 = vmatpush1.xpose.msra.mxu0 0.0
    %1503 = vmatprep.subr.mxu0 0.0
    %1504 = vmatpush1.xpose.msra.mxu0 0.0
    %1505 = vmatprep.subr.mxu0 0.0
    %1506 = vmatpush1.xpose.msra.mxu0 0.0
    %1507 = vmatprep.subr.mxu0 0.0
    %1508 = vmatpush1.xpose.msra.mxu0 0.0
    %1509 = vmatprep.subr.mxu0 0.0
    %1510 = vmatpush1.xpose.msra.mxu0 0.0
    %1511 = vmatprep.subr.mxu0 0.0
    %1512 = vmatpush1.xpose.msra.mxu0 0.0
    %1513 = vmatprep.subr.mxu0 0.0
    %1514 = vmatpush1.xpose.msra.mxu0 0.0
    %1515 = vmatprep.subr.mxu0 0.0
    %1516 = vmatpush1.xpose.msra.mxu0 0.0
    %1517 = vmatprep.subr.mxu0 0.0
    %1518 = vmatpush1.xpose.msra.mxu0 0.0
    %1519 = vmatprep.subr.mxu0 0.0
    %1520 = vmatpush1.xpose.msra.mxu0 0.0
    %1521 = vmatprep.subr.mxu0 0.0
    %1522 = vmatpush1.xpose.msra.mxu0 0.0
    %1523 = vmatprep.subr.mxu0 0.0
    %1524 = vmatpush1.xpose.msra.mxu0 0.0
    %1525 = vmatprep.subr.mxu0 0.0
    %1526 = vmatpush1.xpose.msra.mxu0 0.0
    %1527 = vmatprep.subr.mxu0 0.0
    %1528 = vmatpush1.xpose.msra.mxu0 0.0
    %1529 = vmatprep.subr.mxu0 0.0
    %1530 = vmatpush1.xpose.msra.mxu0 0.0
    %1531 = vmatprep.subr.mxu0 0.0
    %1532 = vmatpush1.xpose.msra.mxu0 0.0
    %1533 = vmatprep.subr.mxu0 0.0
    %1534 = vmatpush1.xpose.msra.mxu0 0.0
    %1535 = vmatprep.subr.mxu0 0.0
    %1536 = vmatpush1.xpose.msra.mxu0 0.0
    %1537 = vmatprep.subr.mxu0 0.0
    %1538 = vmatpush1.xpose.msra.mxu0 0.0
    %1539 = vmatprep.subr.mxu0 0.0
    %1540 = vmatpush1.xpose.msra.mxu0 0.0
    %1541 = vmatprep.subr.mxu0 0.0
    %1542 = vmatpush1.xpose.msra.mxu0 0.0
    %1543 = vmatprep.subr.mxu0 0.0
    %1544 = vmatpush1.xpose.msra.mxu0 0.0
    %1545 = vmatprep.subr.mxu0 0.0
    %1546 = vmatpush1.xpose.msra.mxu0 0.0
    %1547 = vmatprep.subr.mxu0 0.0
    %1548 = vmatpush1.xpose.msra.mxu0 0.0
    %1549 = vmatprep.mubr.f32.mxu0 0.0
    %1550 = vmatmul.mubr.f32.gmra.mrb[0].mxu0 %v1479
    %v1551 = vpop.f32.mrb[0].mxu0
    %v1552 = vadd.f32 0.0, %v1551
    %v1553 = vpop.f32.mrb[0].mxu0
    %1554 = vdwg.mxu0
    %1555 = vrot.lane.b32.xlu0 %v238, 104
    %v1556 = vpop.permute.xlu0 %1555
    %1557 = vrot.lane.b32.xlu0 %v339, 104
    %v1558 = vpop.permute.xlu0 %1557
    %1559 = vrot.lane.b32.xlu0 %v344, 104
    %v1560 = vpop.permute.xlu0 %1559
    %v1561 = vsel %vm447, %v1556, 0
    %v1563 = vsel %vm447, %v1558, 0
    %v1565 = vsel %vm447, %v1560, 0
    %1567 = vmatprep.subr.mxu0 0.0
    %1568 = vmatpush1.xpose.msra.mxu0 %v1563
    %1569 = vmatprep.subr.mxu0 0.0
    %1570 = vmatpush1.xpose.msra.mxu0 %v1565
    %1571 = vmatprep.subr.mxu0 0.0
    %1572 = vmatpush1.xpose.msra.mxu0 0.0
    %1573 = vmatprep.subr.mxu0 0.0
    %1574 = vmatpush1.xpose.msra.mxu0 0.0
    %1575 = vmatprep.subr.mxu0 0.0
    %1576 = vmatpush1.xpose.msra.mxu0 0.0
    %1577 = vmatprep.subr.mxu0 0.0
    %1578 = vmatpush1.xpose.msra.mxu0 0.0
    %1579 = vmatprep.subr.mxu0 0.0
    %1580 = vmatpush1.xpose.msra.mxu0 0.0
    %1581 = vmatprep.subr.mxu0 0.0
    %1582 = vmatpush1.xpose.msra.mxu0 0.0
    %1583 = vmatprep.subr.mxu0 0.0
    %1584 = vmatpush1.xpose.msra.mxu0 0.0
    %1585 = vmatprep.subr.mxu0 0.0
    %1586 = vmatpush1.xpose.msra.mxu0 0.0
    %1587 = vmatprep.subr.mxu0 0.0
    %1588 = vmatpush1.xpose.msra.mxu0 0.0
    %1589 = vmatprep.subr.mxu0 0.0
    %1590 = vmatpush1.xpose.msra.mxu0 0.0
    %1591 = vmatprep.subr.mxu0 0.0
    %1592 = vmatpush1.xpose.msra.mxu0 0.0
    %1593 = vmatprep.subr.mxu0 0.0
    %1594 = vmatpush1.xpose.msra.mxu0 0.0
    %1595 = vmatprep.subr.mxu0 0.0
    %1596 = vmatpush1.xpose.msra.mxu0 0.0
    %1597 = vmatprep.subr.mxu0 0.0
    %1598 = vmatpush1.xpose.msra.mxu0 0.0
    %1599 = vmatprep.subr.mxu0 0.0
    %1600 = vmatpush1.xpose.msra.mxu0 0.0
    %1601 = vmatprep.subr.mxu0 0.0
    %1602 = vmatpush1.xpose.msra.mxu0 0.0
    %1603 = vmatprep.subr.mxu0 0.0
    %1604 = vmatpush1.xpose.msra.mxu0 0.0
    %1605 = vmatprep.subr.mxu0 0.0
    %1606 = vmatpush1.xpose.msra.mxu0 0.0
    %1607 = vmatprep.subr.mxu0 0.0
    %1608 = vmatpush1.xpose.msra.mxu0 0.0
    %1609 = vmatprep.subr.mxu0 0.0
    %1610 = vmatpush1.xpose.msra.mxu0 0.0
    %1611 = vmatprep.subr.mxu0 0.0
    %1612 = vmatpush1.xpose.msra.mxu0 0.0
    %1613 = vmatprep.subr.mxu0 0.0
    %1614 = vmatpush1.xpose.msra.mxu0 0.0
    %1615 = vmatprep.subr.mxu0 0.0
    %1616 = vmatpush1.xpose.msra.mxu0 0.0
    %1617 = vmatprep.subr.mxu0 0.0
    %1618 = vmatpush1.xpose.msra.mxu0 0.0
    %1619 = vmatprep.subr.mxu0 0.0
    %1620 = vmatpush1.xpose.msra.mxu0 0.0
    %1621 = vmatprep.subr.mxu0 0.0
    %1622 = vmatpush1.xpose.msra.mxu0 0.0
    %1623 = vmatprep.subr.mxu0 0.0
    %1624 = vmatpush1.xpose.msra.mxu0 0.0
    %1625 = vmatprep.subr.mxu0 0.0
    %1626 = vmatpush1.xpose.msra.mxu0 0.0
    %1627 = vmatprep.subr.mxu0 0.0
    %1628 = vmatpush1.xpose.msra.mxu0 0.0
    %1629 = vmatprep.subr.mxu0 0.0
    %1630 = vmatpush1.xpose.msra.mxu0 0.0
    %1631 = vmatprep.mubr.f32.mxu0 0.0
    %1632 = vmatmul.mubr.f32.gmra.mrb[0].mxu0 %v1561
    %v1633 = vpop.f32.mrb[0].mxu0
    %v1634 = vadd.f32 0.0, %v1633
    %v1635 = vpop.f32.mrb[0].mxu0
    %1636 = vdwg.mxu0
    %v1637 = vsel %vm445, -1e+09, %v1552
    %v1638 = vsel %vm446, -1e+09, %v1634
    %v1639 = vsel %vm608, %v1637, -inf
    %1640 = vmax.xlane.f32.xlu0 %v1639
    %v1641 = vpop.xlane.xlu0 %1640
    %v1642 = vsel %vm608, %v1638, -inf
    %1643 = vmax.xlane.f32.xlu0 %v1642
    %v1644 = vpop.xlane.xlu0 %1643
    %v1645 = vsub.f32 %v1637, %v1641
    %v1646 = vsub.f32 %v1638, %v1644
    %v1647 = vmul.f32 %v1645, 1.442695
    %v1648 = vpow.pop %v1647
    %v1649 = vmul.f32 %v1646, 1.442695
    %v1650 = vpow.pop %v1649
    %v1651 = vsel %vm608, %v1648, 0.0
    %1652 = vadd.xlane.f32.xlu0 %v1651
    %v1653 = vpop.xlane.xlu0 %1652
    %v1654 = vsel %vm608, %v1650, 0.0
    %1655 = vadd.xlane.f32.xlu0 %v1654
    %v1656 = vpop.xlane.xlu0 %1655
    %v1657 = vrcp.pop %v1653
    %v1658 = vrcp.pop %v1656
    %v1659 = vmul.f32 %v1648, %v1657
    %v1660 = vmul.f32 %v1650, %v1658
    %1661 = vrot.lane.b32.xlu0 %v425, 104
    %v1662 = vpop.permute.xlu0 %1661
    %1663 = vrot.lane.b32.xlu0 %v430, 104
    %v1664 = vpop.permute.xlu0 %1663
    %v1668 = vsel %vm608, %v1659, 0
    %1670 = vmatprep.subr.mxu0 0.0
    %1671 = vmatpush1.msra.mxu0 %v1662
    %1672 = vmatprep.subr.mxu0 0.0
    %1673 = vmatpush1.msra.mxu0 %v1664
    %1674 = vmatprep.subr.mxu0 0.0
    %1675 = vmatpush1.msra.mxu0 0.0
    %1676 = vmatprep.subr.mxu0 0.0
    %1677 = vmatpush1.msra.mxu0 0.0
    %1678 = vmatprep.subr.mxu0 0.0
    %1679 = vmatpush1.msra.mxu0 0.0
    %1680 = vmatprep.subr.mxu0 0.0
    %1681 = vmatpush1.msra.mxu0 0.0
    %1682 = vmatprep.subr.mxu0 0.0
    %1683 = vmatpush1.msra.mxu0 0.0
    %1684 = vmatprep.subr.mxu0 0.0
    %1685 = vmatpush1.msra.mxu0 0.0
    %1686 = vmatprep.subr.mxu0 0.0
    %1687 = vmatpush1.msra.mxu0 0.0
    %1688 = vmatprep.subr.mxu0 0.0
    %1689 = vmatpush1.msra.mxu0 0.0
    %1690 = vmatprep.subr.mxu0 0.0
    %1691 = vmatpush1.msra.mxu0 0.0
    %1692 = vmatprep.subr.mxu0 0.0
    %1693 = vmatpush1.msra.mxu0 0.0
    %1694 = vmatprep.subr.mxu0 0.0
    %1695 = vmatpush1.msra.mxu0 0.0
    %1696 = vmatprep.subr.mxu0 0.0
    %1697 = vmatpush1.msra.mxu0 0.0
    %1698 = vmatprep.subr.mxu0 0.0
    %1699 = vmatpush1.msra.mxu0 0.0
    %1700 = vmatprep.subr.mxu0 0.0
    %1701 = vmatpush1.msra.mxu0 0.0
    %1702 = vmatprep.subr.mxu0 0.0
    %1703 = vmatpush1.msra.mxu0 0.0
    %1704 = vmatprep.subr.mxu0 0.0
    %1705 = vmatpush1.msra.mxu0 0.0
    %1706 = vmatprep.subr.mxu0 0.0
    %1707 = vmatpush1.msra.mxu0 0.0
    %1708 = vmatprep.subr.mxu0 0.0
    %1709 = vmatpush1.msra.mxu0 0.0
    %1710 = vmatprep.subr.mxu0 0.0
    %1711 = vmatpush1.msra.mxu0 0.0
    %1712 = vmatprep.subr.mxu0 0.0
    %1713 = vmatpush1.msra.mxu0 0.0
    %1714 = vmatprep.subr.mxu0 0.0
    %1715 = vmatpush1.msra.mxu0 0.0
    %1716 = vmatprep.subr.mxu0 0.0
    %1717 = vmatpush1.msra.mxu0 0.0
    %1718 = vmatprep.subr.mxu0 0.0
    %1719 = vmatpush1.msra.mxu0 0.0
    %1720 = vmatprep.subr.mxu0 0.0
    %1721 = vmatpush1.msra.mxu0 0.0
    %1722 = vmatprep.subr.mxu0 0.0
    %1723 = vmatpush1.msra.mxu0 0.0
    %1724 = vmatprep.subr.mxu0 0.0
    %1725 = vmatpush1.msra.mxu0 0.0
    %1726 = vmatprep.subr.mxu0 0.0
    %1727 = vmatpush1.msra.mxu0 0.0
    %1728 = vmatprep.subr.mxu0 0.0
    %1729 = vmatpush1.msra.mxu0 0.0
    %1730 = vmatprep.subr.mxu0 0.0
    %1731 = vmatpush1.msra.mxu0 0.0
    %1732 = vmatprep.subr.mxu0 0.0
    %1733 = vmatpush1.msra.mxu0 0.0
    %1734 = vmatprep.mubr.f32.mxu0 0.0
    %1735 = vmatmul.mubr.f32.gmra.mrb[0].mxu0 %v1668
    %v1736 = vpop.f32.mrb[0].mxu0
    %v1737 = vadd.f32 0.0, %v1736
    %v1738 = vpop.f32.mrb[0].mxu0
    %1739 = vdwg.mxu0
    %1740 = vrot.lane.b32.xlu0 %v435, 104
    %v1741 = vpop.permute.xlu0 %1740
    %1742 = vrot.lane.b32.xlu0 %v440, 104
    %v1743 = vpop.permute.xlu0 %1742
    %v1747 = vsel %vm608, %v1660, 0
    %1749 = vmatprep.subr.mxu0 0.0
    %1750 = vmatpush1.msra.mxu0 %v1741
    %1751 = vmatprep.subr.mxu0 0.0
    %1752 = vmatpush1.msra.mxu0 %v1743
    %1753 = vmatprep.subr.mxu0 0.0
    %1754 = vmatpush1.msra.mxu0 0.0
    %1755 = vmatprep.subr.mxu0 0.0
    %1756 = vmatpush1.msra.mxu0 0.0
    %1757 = vmatprep.subr.mxu0 0.0
    %1758 = vmatpush1.msra.mxu0 0.0
    %1759 = vmatprep.subr.mxu0 0.0
    %1760 = vmatpush1.msra.mxu0 0.0
    %1761 = vmatprep.subr.mxu0 0.0
    %1762 = vmatpush1.msra.mxu0 0.0
    %1763 = vmatprep.subr.mxu0 0.0
    %1764 = vmatpush1.msra.mxu0 0.0
    %1765 = vmatprep.subr.mxu0 0.0
    %1766 = vmatpush1.msra.mxu0 0.0
    %1767 = vmatprep.subr.mxu0 0.0
    %1768 = vmatpush1.msra.mxu0 0.0
    %1769 = vmatprep.subr.mxu0 0.0
    %1770 = vmatpush1.msra.mxu0 0.0
    %1771 = vmatprep.subr.mxu0 0.0
    %1772 = vmatpush1.msra.mxu0 0.0
    %1773 = vmatprep.subr.mxu0 0.0
    %1774 = vmatpush1.msra.mxu0 0.0
    %1775 = vmatprep.subr.mxu0 0.0
    %1776 = vmatpush1.msra.mxu0 0.0
    %1777 = vmatprep.subr.mxu0 0.0
    %1778 = vmatpush1.msra.mxu0 0.0
    %1779 = vmatprep.subr.mxu0 0.0
    %1780 = vmatpush1.msra.mxu0 0.0
    %1781 = vmatprep.subr.mxu0 0.0
    %1782 = vmatpush1.msra.mxu0 0.0
    %1783 = vmatprep.subr.mxu0 0.0
    %1784 = vmatpush1.msra.mxu0 0.0
    %1785 = vmatprep.subr.mxu0 0.0
    %1786 = vmatpush1.msra.mxu0 0.0
    %1787 = vmatprep.subr.mxu0 0.0
    %1788 = vmatpush1.msra.mxu0 0.0
    %1789 = vmatprep.subr.mxu0 0.0
    %1790 = vmatpush1.msra.mxu0 0.0
    %1791 = vmatprep.subr.mxu0 0.0
    %1792 = vmatpush1.msra.mxu0 0.0
    %1793 = vmatprep.subr.mxu0 0.0
    %1794 = vmatpush1.msra.mxu0 0.0
    %1795 = vmatprep.subr.mxu0 0.0
    %1796 = vmatpush1.msra.mxu0 0.0
    %1797 = vmatprep.subr.mxu0 0.0
    %1798 = vmatpush1.msra.mxu0 0.0
    %1799 = vmatprep.subr.mxu0 0.0
    %1800 = vmatpush1.msra.mxu0 0.0
    %1801 = vmatprep.subr.mxu0 0.0
    %1802 = vmatpush1.msra.mxu0 0.0
    %1803 = vmatprep.subr.mxu0 0.0
    %1804 = vmatpush1.msra.mxu0 0.0
    %1805 = vmatprep.subr.mxu0 0.0
    %1806 = vmatpush1.msra.mxu0 0.0
    %1807 = vmatprep.subr.mxu0 0.0
    %1808 = vmatpush1.msra.mxu0 0.0
    %1809 = vmatprep.subr.mxu0 0.0
    %1810 = vmatpush1.msra.mxu0 0.0
    %1811 = vmatprep.subr.mxu0 0.0
    %1812 = vmatpush1.msra.mxu0 0.0
    %1813 = vmatprep.mubr.f32.mxu0 0.0
    %1814 = vmatmul.mubr.f32.gmra.mrb[0].mxu0 %v1747
    %v1815 = vpop.f32.mrb[0].mxu0
    %v1816 = vadd.f32 0.0, %v1815
    %v1817 = vpop.f32.mrb[0].mxu0
    %1818 = vdwg.mxu0
    %1821 = vrot.lane.b32.xlu0 %v1043, 8
    %v1822 = vpop.permute.xlu0 %1821
    %1823 = vrot.lane.b32.xlu0 %v1124, 8
    %v1824 = vpop.permute.xlu0 %1823
    %1829 = vrot.lane.b32.xlu0 %v1391, 16
    %v1830 = vpop.permute.xlu0 %1829
    %1831 = vrot.lane.b32.xlu0 %v1470, 16
    %v1832 = vpop.permute.xlu0 %1831
    %1837 = vrot.lane.b32.xlu0 %v1737, 24
    %v1838 = vpop.permute.xlu0 %1837
    %1839 = vrot.lane.b32.xlu0 %v1816, 24
    %v1840 = vpop.permute.xlu0 %1839
    %v1843 = vsel %vm447, %v701, %v1822
    %v1844 = vsel %vm447, %v774, %v1824
    %v1845 = vsel %vm608, %v1843, %v1830
    %v1846 = vsel %vm608, %v1844, %v1832
    %vm1847 = vcmask 195584
    %v1848 = vsel %vm1847, %v1845, %v1838
    %v1849 = vsel %vm1847, %v1846, %v1840
    %v1850 = vld [vmem:[%s9] sm:$0xff]
    %v1851 = vld [vmem:[%s9 + $0x8] sm:$0xff]
    %v1852 = vld [vmem:[%s9 + $0x10] sm:$0xff]
    %v1853 = vld [vmem:[%s9 + $0x18] sm:$0xff]
    %v1854 = vld [vmem:[%s10] sm:$0x1]
    %v1856 = vlaneseq
    %v1857 = vshrl.u32 %v1856, 7
    %v1858 = vsub.s32 0, %v1857
    %v1859 = vrot.slane %v1854, %v1858
    %v1862 = vsel %vm155, %v1848, 0
    %v1865 = vsel %vm155, %v1849, 0
    %1867 = vmatprep.subr.mxu0 0.0
    %1868 = vmatpush1.msra.mxu0 %v1850
    %1869 = vmatprep.subr.mxu0 0.0
    %1870 = vmatpush1.msra.mxu0 %v1851
    %1871 = vmatprep.subr.mxu0 0.0
    %1872 = vmatpush1.msra.mxu0 %v1852
    %1873 = vmatprep.subr.mxu0 0.0
    %1874 = vmatpush1.msra.mxu0 %v1853
    %1875 = vmatprep.subr.mxu0 0.0
    %1876 = vmatpush1.msra.mxu0 0.0
    %1877 = vmatprep.subr.mxu0 0.0
    %1878 = vmatpush1.msra.mxu0 0.0
    %1879 = vmatprep.subr.mxu0 0.0
    %1880 = vmatpush1.msra.mxu0 0.0
    %1881 = vmatprep.subr.mxu0 0.0
    %1882 = vmatpush1.msra.mxu0 0.0
    %1883 = vmatprep.subr.mxu0 0.0
    %1884 = vmatpush1.msra.mxu0 0.0
    %1885 = vmatprep.subr.mxu0 0.0
    %1886 = vmatpush1.msra.mxu0 0.0
    %1887 = vmatprep.subr.mxu0 0.0
    %1888 = vmatpush1.msra.mxu0 0.0
    %1889 = vmatprep.subr.mxu0 0.0
    %1890 = vmatpush1.msra.mxu0 0.0
    %1891 = vmatprep.subr.mxu0 0.0
    %1892 = vmatpush1.msra.mxu0 0.0
    %1893 = vmatprep.subr.mxu0 0.0
    %1894 = vmatpush1.msra.mxu0 0.0
    %1895 = vmatprep.subr.mxu0 0.0
    %1896 = vmatpush1.msra.mxu0 0.0
    %1897 = vmatprep.subr.mxu0 0.0
    %1898 = vmatpush1.msra.mxu0 0.0
    %1899 = vmatprep.subr.mxu0 0.0
    %1900 = vmatpush1.msra.mxu0 0.0
    %1901 = vmatprep.subr.mxu0 0.0
    %1902 = vmatpush1.msra.mxu0 0.0
    %1903 = vmatprep.subr.mxu0 0.0
    %1904 = vmatpush1.msra.mxu0 0.0
    %1905 = vmatprep.subr.mxu0 0.0
    %1906 = vmatpush1.msra.mxu0 0.0
    %1907 = vmatprep.subr.mxu0 0.0
    %1908 = vmatpush1.msra.mxu0 0.0
    %1909 = vmatprep.subr.mxu0 0.0
    %1910 = vmatpush1.msra.mxu0 0.0
    %1911 = vmatprep.subr.mxu0 0.0
    %1912 = vmatpush1.msra.mxu0 0.0
    %1913 = vmatprep.subr.mxu0 0.0
    %1914 = vmatpush1.msra.mxu0 0.0
    %1915 = vmatprep.subr.mxu0 0.0
    %1916 = vmatpush1.msra.mxu0 0.0
    %1917 = vmatprep.subr.mxu0 0.0
    %1918 = vmatpush1.msra.mxu0 0.0
    %1919 = vmatprep.subr.mxu0 0.0
    %1920 = vmatpush1.msra.mxu0 0.0
    %1921 = vmatprep.subr.mxu0 0.0
    %1922 = vmatpush1.msra.mxu0 0.0
    %1923 = vmatprep.subr.mxu0 0.0
    %1924 = vmatpush1.msra.mxu0 0.0
    %1925 = vmatprep.subr.mxu0 0.0
    %1926 = vmatpush1.msra.mxu0 0.0
    %1927 = vmatprep.subr.mxu0 0.0
    %1928 = vmatpush1.msra.mxu0 0.0
    %1929 = vmatprep.subr.mxu0 0.0
    %1930 = vmatpush1.msra.mxu0 0.0
    %1931 = vmatprep.mubr.f32.mxu0 0.0
    %1932 = vmatmul.mubr.f32.gmra.mrb[0].mxu0 %v1862
    %v1933 = vpop.f32.mrb[0].mxu0
    %v1934 = vadd.f32 %v1859, %v1933
    %v1935 = vpop.f32.mrb[0].mxu0
    %1936 = vmatprep.mubr.f32.mxu0 0.0
    %1937 = vmatmul.mubr.f32.gmra.mrb[0].mxu0 %v1865
    %v1938 = vpop.f32.mrb[0].mxu0
    %v1939 = vadd.f32 %v1859, %v1938
    %v1940 = vpop.f32.mrb[0].mxu0
    %1941 = vdwg.mxu0
    %v1942 = vadd.f32 %v138, %v1934
    %v1943 = vadd.f32 %v139, %v1939
    %v1944 = vld [vmem:[%s11] sm:$0x1]
    %v1945 = vld [vmem:[%s12] sm:$0x1]
    %v1946 = vsel %vm155, %v1942, 0.0
    %1947 = vadd.xlane.f32.xlu0 %v1946
    %v1948 = vpop.xlane.xlu0 %1947
    %v1949 = vsel %vm155, %v1943, 0.0
    %1950 = vadd.xlane.f32.xlu0 %v1949
    %v1951 = vpop.xlane.xlu0 %1950
    %v1952 = vrcp.pop 32.0
    %v1953 = vmul.f32 %v1948, %v1952
    %v1954 = vmul.f32 %v1951, %v1952
    %v1955 = vsub.f32 %v1942, %v1953
    %v1956 = vsub.f32 %v1943, %v1954
    %v1957 = vmul.f32 %v1955, %v1955
    %v1958 = vmul.f32 %v1956, %v1956
    %v1959 = vsel %vm155, %v1957, 0.0
    %1960 = vadd.xlane.f32.xlu0 %v1959
    %v1961 = vpop.xlane.xlu0 %1960
    %v1962 = vsel %vm155, %v1958, 0.0
    %1963 = vadd.xlane.f32.xlu0 %v1962
    %v1964 = vpop.xlane.xlu0 %1963
    %v1965 = vmul.f32 %v1961, %v1952
    %v1966 = vmul.f32 %v1964, %v1952
    %v1967 = vadd.f32 %v1965, 1e-05
    %v1968 = vadd.f32 %v1966, 1e-05
    %v1969 = vrsqrt.pop %v1967
    %v1970 = vrsqrt.pop %v1968
    %v1971 = vmul.f32 %v1955, %v1969
    %v1972 = vmul.f32 %v1956, %v1970
    %v1974 = vlaneseq
    %v1975 = vshrl.u32 %v1974, 7
    %v1976 = vsub.s32 0, %v1975
    %v1977 = vrot.slane %v1944, %v1976
    %v1979 = vmul.f32 %v1971, %v1977
    %v1980 = vmul.f32 %v1972, %v1977
    %v1982 = vlaneseq
    %v1983 = vshrl.u32 %v1982, 7
    %v1984 = vsub.s32 0, %v1983
    %v1985 = vrot.slane %v1945, %v1984
    %v1987 = vadd.f32 %v1979, %v1985
    %v1988 = vadd.f32 %v1980, %v1985
    %1989 = vst.msk [vmem:[#allocation14] sm:$0xff] %vm155, %v1987
    %1990 = vst.msk [vmem:[#allocation14 + $0x8] sm:$0xff] %vm155, %v1988
    // Predicated region
    $region82: #{tpu_custom_call.1} parent=1 // pred_check
      _
    $region83: #{tpu_custom_call.1} parent=1 // pred_check_branch
      %1992 = sbr.rel (0) target = $region85
    $region84: #{tpu_custom_call.1} parent=1 // pred_region
      %s1994 = ssub.s32 256, 256
      %1995 = vsyncadd [#allocation4], %s1994
      %s1996 = sshll.u32 [#allocation14], 4
      %s1997 = int_to_ptr.vmem [resolvable:$true] %s1996
      %2002 = dma.vmem_to_hbm [thread:$0]  %s1997, 256, %s13, [#allocation4], 128, 128, 8
    $region85: #{tpu_custom_call.1} parent=1 // pred_fallthru
      _
    // Predicated region
    $region86: #{tpu_custom_call.1} parent=1 // pred_check
      _
    $region87: #{tpu_custom_call.1} parent=1 // pred_check_branch
      %2004 = sbr.rel (0) target = $region89
    $region88: #{tpu_custom_call.1} parent=1 // pred_region
      %2005 = dma.done [#allocation4], 256
    $region89: #{tpu_custom_call.1} parent=1 // pred_fallthru
      _
    %2006 = vsyncpa [#allocation3], 1
    %2007 = vsyncpa [#allocation6], 1
    %2008 = vsyncpa [#allocation9], 1
    %2009 = vsyncpa [#allocation12], 1
    %2010 = vsyncpa [#allocation4], 1

</llo_original>
